<compile_context>
chip_gen: v5e
topology: v5e:2x2
jax: 0.10.0
libtpu: 0.0.40
codegen_flags: <defaults>
</compile_context>

<pallas_src>
import math

import jax
import jax.numpy as jnp
from jax import lax
from jax.experimental import pallas as pl
from jax.experimental.pallas import tpu as pltpu


def _method_cfg_macro_encoder_kernel(
    n_valid_ref,       # (B,)      int32  SMEM (scalar prefetch): valid nodes / method
    idx_ref,           # (1, N, 2) int32  : [...,0]=control-kind id, [...,1]=expr row (=NE if none)
    expr_ref,          # (1, NE, De) bf16 : encoded_combined_code_expressions (per method)
    kind_tab_ref,      # (V, D)  bf16 : control-kind embedding @ W1k (pre-folded)
    w1e_ref,           # (De, D) bf16
    b1_ref,            # (1, D)  f32
    wq_ref, wk_ref, wv_ref, wo_ref,   # (D, D) bf16 each (wq pre-scaled by 1/sqrt(D))
    bo_ref,            # (1, D)  f32
    wgp_ref, wgu_ref,  # (D, D)  bf16 (gate weights on prev-state / state-update)
    bg_ref,            # (1, D)  f32
    out_ref,           # (1, N, D) f32 : gated cfg_nodes_encodings (== macro flattened)
):
    N = idx_ref.shape[1]
    V = kind_tab_ref.shape[0]
    NE = expr_ref.shape[1]

    f32 = jnp.float32
    bf16 = jnp.bfloat16

    b = pl.program_id(0)
    n_valid = n_valid_ref[b]

    ids = idx_ref[0]                                   # (N, 2) i32
    kinds = ids[:, 0:1]                                # (N, 1) i32
    eidx = ids[:, 1:2]                                 # (N, 1) i32 (NE == "no expression")

    # ---------------- CFGNodeEncoder ----------------
    # control-kind contribution: one-hot @ (emb @ W1k) — embedding folded into W1k
    onehot_k = (lax.broadcasted_iota(jnp.int32, (N, V), 1) == kinds).astype(bf16)
    kind_contrib = jnp.dot(onehot_k, kind_tab_ref[...],
                           preferred_element_type=f32)                  # (N, D)

    # scatter expression encodings into node rows (sentinel index ⇒ all-zero row)
    onehot_e = (lax.broadcasted_iota(jnp.int32, (N, NE), 1) == eidx).astype(bf16)
    expr_per_node = jnp.dot(onehot_e, expr_ref[0],
                            preferred_element_type=f32)                 # (N, De)

    # concat([expr, kind_emb]) @ W1  ==  expr @ W1e + kind_emb @ W1k
    h = (jnp.dot(expr_per_node.astype(bf16), w1e_ref[...],
                 preferred_element_type=f32)
         + kind_contrib + b1_ref[...])
    h = jnp.maximum(h, 0.0)                            # encoded_cfg_nodes (N, D) f32
    # TODO(synk): dropout / optional NormWrapper are identity here (inference).

    # --------- SingleFlatCFGNodesSeqMacroEncoder (per-method self-attention) ---
    hb = h.astype(bf16)
    q = jnp.dot(hb, wq_ref[...], preferred_element_type=f32)   # wq pre-scaled by 1/sqrt(D)
    k = jnp.dot(hb, wk_ref[...], preferred_element_type=f32)
    v = jnp.dot(hb, wv_ref[...], preferred_element_type=f32)

    scores = lax.dot_general(q.astype(bf16), k.astype(bf16),
                             (((1,), (1,)), ((), ())),
                             preferred_element_type=f32)                # (N, N) f32
    key_valid = lax.broadcasted_iota(jnp.int32, (N, N), 1) < n_valid
    scores = jnp.where(key_valid, scores, -1e30)

    m = jnp.max(scores, axis=-1, keepdims=True)
    e = jnp.exp(scores - m)
    attn = e * pl.reciprocal(jnp.sum(e, axis=-1, keepdims=True), approx=True)

    ctx = jnp.dot(attn.astype(bf16), v.astype(bf16),
                  preferred_element_type=f32)                           # (N, D)
    new_h = jnp.maximum(
        jnp.dot(ctx.astype(bf16), wo_ref[...], preferred_element_type=f32)
        + bo_ref[...], 0.0)

    # ---------------- StateUpdater ("gate") ----------------
    g = jax.nn.sigmoid(
        jnp.dot(hb, wgp_ref[...], preferred_element_type=f32)
        + jnp.dot(new_h.astype(bf16), wgu_ref[...], preferred_element_type=f32)
        + bg_ref[...])
    out = g * h + (1.0 - g) * new_h                                     # (N, D) f32

    # zero padded node rows (keeps the padded output clean / deterministic)
    row_valid = lax.broadcasted_iota(jnp.int32, (N, 1), 0) < n_valid
    out_ref[0] = jnp.where(row_valid, out, 0.0)


def method_cfg_macro_encoder(idx_packed, n_valid,
                             encoded_combined_code_expressions,
                             encoded_identifiers, prep_params):
    """Returns (macro_encodings_flattened, cfg_nodes_encodings).

    In this configuration the two are the same tensor (the module builds the
    FlattenedTensor from the post-gate cfg_nodes_encodings), so the kernel
    emits it once and we return the same array twice.

    `encoded_identifiers` is accepted for signature parity with the PyTorch
    forward but is only consumed by the UpperASTPaths encoder type.
    """
    # TODO(synk): FlattenedTensor's unflattener_mask_getter / unflatten fn
    # (per-example ragged un-flattening) has no in-kernel equivalent; we return
    # the (B, N, D) padded-per-method tensor directly.
    del encoded_identifiers

    B, N, _ = idx_packed.shape
    NE, De = encoded_combined_code_expressions.shape[1:]
    D = prep_params["w1e"].shape[1]

    weight_inputs = (
        prep_params["kind_table"], prep_params["w1e"], prep_params["b1"],
        prep_params["wq"], prep_params["wk"], prep_params["wv"],
        prep_params["wo"], prep_params["bo"],
        prep_params["wg_prev"], prep_params["wg_upd"], prep_params["bg"],
    )

    def resident(shape):
        # full-array block, same block index every step -> stays VMEM-resident
        return pl.BlockSpec(shape, lambda b, nv, _s=shape: tuple(0 for _ in _s))

    grid_spec = pltpu.PrefetchScalarGridSpec(
        num_scalar_prefetch=1,
        grid=(B,),
        in_specs=[
            pl.BlockSpec((1, N, 2), lambda b, nv: (b, 0, 0)),
            pl.BlockSpec((1, NE, De), lambda b, nv: (b, 0, 0)),
        ] + [resident(w.shape) for w in weight_inputs],
        out_specs=pl.BlockSpec((1, N, D), lambda b, nv: (b, 0, 0)),
    )

    out = pl.pallas_call(
        _method_cfg_macro_encoder_kernel,
        out_shape=jax.ShapeDtypeStruct((B, N, D), jnp.float32),
        grid_spec=grid_spec,
        compiler_params=pltpu.CompilerParams(
            dimension_semantics=("parallel",)),
    )(n_valid.astype(jnp.int32),
      idx_packed.astype(jnp.int32),
      encoded_combined_code_expressions.astype(jnp.bfloat16),
      *weight_inputs)

    return out, out


def _init_params(key, expr_dim, kind_emb_dim, cfg_node_dim, kind_vocab):
    ks = jax.random.split(key, 12)

    def lin(k, fan_in, shape):
        return (jax.random.normal(k, shape, jnp.float32)
                * (1.0 / math.sqrt(fan_in)))

    D = cfg_node_dim
    return {
        "emb": jax.random.normal(ks[0], (kind_vocab, kind_emb_dim), jnp.float32) * 0.1,
        "w1e": lin(ks[1], expr_dim + kind_emb_dim, (expr_dim, D)),
        "w1k": lin(ks[2], expr_dim + kind_emb_dim, (kind_emb_dim, D)),
        "b1": jnp.zeros((1, D), jnp.float32),
        "wq": lin(ks[3], D, (D, D)),
        "wk": lin(ks[4], D, (D, D)),
        "wv": lin(ks[5], D, (D, D)),
        "wo": lin(ks[6], D, (D, D)),
        "bo": jnp.zeros((1, D), jnp.float32),
        "wg_prev": lin(ks[7], 2 * D, (D, D)),
        "wg_upd": lin(ks[8], 2 * D, (D, D)),
        "bg": jnp.zeros((1, D), jnp.float32),
    }


def _prepare_params(params, cfg_node_dim):
    """Fold constants into weights and cast matmul operands to bf16."""
    bf16 = jnp.bfloat16
    scale = 1.0 / math.sqrt(cfg_node_dim)
    return {
        # control-kind embedding folded into W1k
        "kind_table": jnp.dot(params["emb"], params["w1k"]).astype(bf16),
        "w1e": params["w1e"].astype(bf16),
        "b1": params["b1"].astype(jnp.float32),
        "wq": (params["wq"] * scale).astype(bf16),   # 1/sqrt(D) folded in
        "wk": params["wk"].astype(bf16),
        "wv": params["wv"].astype(bf16),
        "wo": params["wo"].astype(bf16),
        "bo": params["bo"].astype(jnp.float32),
        "wg_prev": params["wg_prev"].astype(bf16),
        "wg_upd": params["wg_upd"].astype(bf16),
        "bg": params["bg"].astype(jnp.float32),
    }


if __name__ == "__main__":
    # Small shapes consistent with the module's forward pass.
    B = 8                 # methods per batch (grid axis, megacore-parallel)
    N_NODES = 16          # padded CFG nodes per method
    N_EXPR = 16           # padded expression rows per method
    EXPR_DIM = 64         # combined_micro_expression_dim
    KIND_EMB_DIM = 32     # cfg_node_control_kinds_embedding_dim (folded away)
    CFG_NODE_DIM = 128    # params.cfg_node_encoding_dim (lane-dense output)
    KIND_VOCAB = 8        # |pdg_node_control_kinds|
    IDENT_DIM = 32        # identifier_embedding_dim (unused by this encoder type)
    N_IDENTS = 8

    key = jax.random.PRNGKey(0)
    k_in, k_id, k_kind, k_params = jax.random.split(key, 4)

    # code_task_input.pdg equivalents (deterministic):
    n_valid = jnp.array([16, 12, 9, 16, 5, 14, 11, 7], dtype=jnp.int32)   # (B,)
    node_ids = jnp.arange(N_NODES)
    valid = node_ids[None, :] < n_valid[:, None]                          # (B, N)
    has_expr = valid & ((node_ids[None, :] % 4) != 3)
    expr_idx = jnp.cumsum(has_expr.astype(jnp.int32), axis=1) - 1
    expr_idx = jnp.where(has_expr, expr_idx, N_EXPR)                      # NE = sentinel
    kind_ids = jax.random.randint(k_kind, (B, N_NODES), 0, KIND_VOCAB)
    kind_ids = jnp.where(valid, kind_ids, 0)
    idx_packed = jnp.stack([kind_ids, expr_idx], axis=-1).astype(jnp.int32)  # (B, N, 2)

    encoded_combined_code_expressions = jax.random.normal(
        k_in, (B, N_EXPR, EXPR_DIM), jnp.float32)
    encoded_identifiers = jax.random.normal(
        k_id, (N_IDENTS, IDENT_DIM), jnp.float32)   # unused by this encoder type

    params = _init_params(k_params, EXPR_DIM, KIND_EMB_DIM, CFG_NODE_DIM, KIND_VOCAB)
    prep = _prepare_params(params, CFG_NODE_DIM)

    macro_flat, cfg_nodes = method_cfg_macro_encoder(
        idx_packed, n_valid, encoded_combined_code_expressions,
        encoded_identifiers, prep)
    jax.block_until_ready((macro_flat, cfg_nodes))

    assert macro_flat.shape == (B, N_NODES, CFG_NODE_DIM)
    assert cfg_nodes.shape == (B, N_NODES, CFG_NODE_DIM)
    assert bool(jnp.all(jnp.isfinite(macro_flat)))
    # padded node rows are exactly zero
    assert bool(jnp.all(jnp.where(valid[..., None], True, cfg_nodes == 0.0)))
    print("KERNEL_OK")
</pallas_src>

<mosaic_0001>
module attributes {stable_mosaic.version = 11 : i64} {
  func.func @_method_cfg_macro_encoder_kernel(%arg0: i32, %arg1: memref<8xi32, #tpu.memory_space<smem>>, %arg2: memref<1x16x2xi32, #tpu.memory_space<vmem>>, %arg3: memref<1x16x64xbf16, #tpu.memory_space<vmem>>, %arg4: memref<8x128xbf16, #tpu.memory_space<vmem>>, %arg5: memref<64x128xbf16, #tpu.memory_space<vmem>>, %arg6: memref<1x128xf32, #tpu.memory_space<vmem>>, %arg7: memref<128x128xbf16, #tpu.memory_space<vmem>>, %arg8: memref<128x128xbf16, #tpu.memory_space<vmem>>, %arg9: memref<128x128xbf16, #tpu.memory_space<vmem>>, %arg10: memref<128x128xbf16, #tpu.memory_space<vmem>>, %arg11: memref<1x128xf32, #tpu.memory_space<vmem>>, %arg12: memref<128x128xbf16, #tpu.memory_space<vmem>>, %arg13: memref<128x128xbf16, #tpu.memory_space<vmem>>, %arg14: memref<1x128xf32, #tpu.memory_space<vmem>>, %arg15: memref<1x16x128xf32, #tpu.memory_space<vmem>>) attributes {dimension_semantics = [#tpu.dimension_semantics<parallel>], iteration_bounds = array<i64: 8>, scalar_prefetch = 1 : i64, scratch_operands = 0 : i64, tpu.core_type = #tpu.core_type<tc>, window_params = [{transform_indices = @transform_0, window_bounds = array<i64: 1, 16, 2>}, {transform_indices = @transform_1, window_bounds = array<i64: 1, 16, 64>}, {pipeline_mode = #tpu.pipeline_mode<synchronous>, transform_indices = @transform_2, window_bounds = array<i64: 8, 128>}, {pipeline_mode = #tpu.pipeline_mode<synchronous>, transform_indices = @transform_3, window_bounds = array<i64: 64, 128>}, {pipeline_mode = #tpu.pipeline_mode<synchronous>, transform_indices = @transform_4, window_bounds = array<i64: 1, 128>}, {pipeline_mode = #tpu.pipeline_mode<synchronous>, transform_indices = @transform_5, window_bounds = array<i64: 128, 128>}, {pipeline_mode = #tpu.pipeline_mode<synchronous>, transform_indices = @transform_6, window_bounds = array<i64: 128, 128>}, {pipeline_mode = #tpu.pipeline_mode<synchronous>, transform_indices = @transform_7, window_bounds = array<i64: 128, 128>}, {pipeline_mode = #tpu.pipeline_mode<synchronous>, transform_indices = @transform_8, window_bounds = array<i64: 128, 128>}, {pipeline_mode = #tpu.pipeline_mode<synchronous>, transform_indices = @transform_9, window_bounds = array<i64: 1, 128>}, {pipeline_mode = #tpu.pipeline_mode<synchronous>, transform_indices = @transform_10, window_bounds = array<i64: 128, 128>}, {pipeline_mode = #tpu.pipeline_mode<synchronous>, transform_indices = @transform_11, window_bounds = array<i64: 128, 128>}, {pipeline_mode = #tpu.pipeline_mode<synchronous>, transform_indices = @transform_12, window_bounds = array<i64: 1, 128>}, {transform_indices = @transform_13, window_bounds = array<i64: 1, 16, 128>}]} {
    %0 = arith.index_cast %arg0 : i32 to index
    %1 = memref.load %arg1[%0] : memref<8xi32, #tpu.memory_space<smem>>
    %c0 = arith.constant 0 : index
    %c0_0 = arith.constant 0 : index
    %c0_1 = arith.constant 0 : index
    %2 = vector.load %arg2[%c0, %c0_0, %c0_1] : memref<1x16x2xi32, #tpu.memory_space<vmem>>, vector<1x16x2xi32>
    %3 = vector.shape_cast %2 : vector<1x16x2xi32> to vector<16x2xi32>
    %4 = vector.extract_strided_slice %3 {offsets = [0, 0], sizes = [16, 1], strides = [1, 1]} : vector<16x2xi32> to vector<16x1xi32>
    %5 = vector.extract_strided_slice %3 {offsets = [0, 1], sizes = [16, 1], strides = [1, 1]} : vector<16x2xi32> to vector<16x1xi32>
    %6 = tpu.iota {dimensions = array<i32: 1>} : vector<16x8xi32>
    %7 = vector.broadcast %4 : vector<16x1xi32> to vector<16x8xi32>
    %8 = arith.cmpi eq, %6, %7 : vector<16x8xi32>
    %9 = arith.extui %8 : vector<16x8xi1> to vector<16x8xi32>
    %10 = arith.sitofp %9 : vector<16x8xi32> to vector<16x8xf32>
    %11 = arith.truncf %10 : vector<16x8xf32> to vector<16x8xbf16>
    %c0_2 = arith.constant 0 : index
    %c0_3 = arith.constant 0 : index
    %12 = vector.load %arg4[%c0_2, %c0_3] : memref<8x128xbf16, #tpu.memory_space<vmem>>, vector<8x128xbf16>
    %cst = arith.constant dense<0.000000e+00> : vector<16x128xf32>
    %13 = tpu.matmul %11, %12, %cst {dimension_numbers = #tpu.dot_dimension_numbers<[1], [0], [0], [1], [0, 0, 1, 1], [], []>} : vector<16x8xbf16>, vector<8x128xbf16>, vector<16x128xf32> -> vector<16x128xf32>
    %14 = tpu.iota {dimensions = array<i32: 1>} : vector<16x16xi32>
    %15 = vector.broadcast %5 : vector<16x1xi32> to vector<16x16xi32>
    %16 = arith.cmpi eq, %14, %15 : vector<16x16xi32>
    %17 = arith.extui %16 : vector<16x16xi1> to vector<16x16xi32>
    %18 = arith.sitofp %17 : vector<16x16xi32> to vector<16x16xf32>
    %19 = arith.truncf %18 : vector<16x16xf32> to vector<16x16xbf16>
    %c0_4 = arith.constant 0 : index
    %c0_5 = arith.constant 0 : index
    %c0_6 = arith.constant 0 : index
    %20 = vector.load %arg3[%c0_4, %c0_5, %c0_6] : memref<1x16x64xbf16, #tpu.memory_space<vmem>>, vector<1x16x64xbf16>
    %21 = vector.shape_cast %20 : vector<1x16x64xbf16> to vector<16x64xbf16>
    %cst_7 = arith.constant dense<0.000000e+00> : vector<16x64xf32>
    %22 = tpu.matmul %19, %21, %cst_7 {dimension_numbers = #tpu.dot_dimension_numbers<[1], [0], [0], [1], [0, 0, 1, 1], [], []>} : vector<16x16xbf16>, vector<16x64xbf16>, vector<16x64xf32> -> vector<16x64xf32>
    %23 = arith.truncf %22 : vector<16x64xf32> to vector<16x64xbf16>
    %c0_8 = arith.constant 0 : index
    %c0_9 = arith.constant 0 : index
    %24 = vector.load %arg5[%c0_8, %c0_9] : memref<64x128xbf16, #tpu.memory_space<vmem>>, vector<64x128xbf16>
    %cst_10 = arith.constant dense<0.000000e+00> : vector<16x128xf32>
    %25 = tpu.matmul %23, %24, %cst_10 {dimension_numbers = #tpu.dot_dimension_numbers<[1], [0], [0], [1], [0, 0, 1, 1], [], []>} : vector<16x64xbf16>, vector<64x128xbf16>, vector<16x128xf32> -> vector<16x128xf32>
    %26 = arith.addf %25, %13 : vector<16x128xf32>
    %c0_11 = arith.constant 0 : index
    %c0_12 = arith.constant 0 : index
    %27 = vector.load %arg6[%c0_11, %c0_12] : memref<1x128xf32, #tpu.memory_space<vmem>>, vector<1x128xf32>
    %28 = vector.broadcast %27 : vector<1x128xf32> to vector<16x128xf32>
    %29 = arith.addf %26, %28 : vector<16x128xf32>
    %cst_13 = arith.constant 0.000000e+00 : f32
    %30 = vector.broadcast %cst_13 : f32 to vector<16x128xf32>
    %31 = arith.maximumf %29, %30 : vector<16x128xf32>
    %32 = arith.truncf %31 : vector<16x128xf32> to vector<16x128xbf16>
    %c0_14 = arith.constant 0 : index
    %c0_15 = arith.constant 0 : index
    %33 = vector.load %arg7[%c0_14, %c0_15] : memref<128x128xbf16, #tpu.memory_space<vmem>>, vector<128x128xbf16>
    %cst_16 = arith.constant dense<0.000000e+00> : vector<16x128xf32>
    %34 = tpu.matmul %32, %33, %cst_16 {dimension_numbers = #tpu.dot_dimension_numbers<[1], [0], [0], [1], [0, 0, 1, 1], [], []>} : vector<16x128xbf16>, vector<128x128xbf16>, vector<16x128xf32> -> vector<16x128xf32>
    %c0_17 = arith.constant 0 : index
    %c0_18 = arith.constant 0 : index
    %35 = vector.load %arg8[%c0_17, %c0_18] : memref<128x128xbf16, #tpu.memory_space<vmem>>, vector<128x128xbf16>
    %cst_19 = arith.constant dense<0.000000e+00> : vector<16x128xf32>
    %36 = tpu.matmul %32, %35, %cst_19 {dimension_numbers = #tpu.dot_dimension_numbers<[1], [0], [0], [1], [0, 0, 1, 1], [], []>} : vector<16x128xbf16>, vector<128x128xbf16>, vector<16x128xf32> -> vector<16x128xf32>
    %c0_20 = arith.constant 0 : index
    %c0_21 = arith.constant 0 : index
    %37 = vector.load %arg9[%c0_20, %c0_21] : memref<128x128xbf16, #tpu.memory_space<vmem>>, vector<128x128xbf16>
    %cst_22 = arith.constant dense<0.000000e+00> : vector<16x128xf32>
    %38 = tpu.matmul %32, %37, %cst_22 {dimension_numbers = #tpu.dot_dimension_numbers<[1], [0], [0], [1], [0, 0, 1, 1], [], []>} : vector<16x128xbf16>, vector<128x128xbf16>, vector<16x128xf32> -> vector<16x128xf32>
    %39 = arith.truncf %34 : vector<16x128xf32> to vector<16x128xbf16>
    %40 = arith.truncf %36 : vector<16x128xf32> to vector<16x128xbf16>
    %cst_23 = arith.constant dense<0.000000e+00> : vector<16x16xf32>
    %41 = tpu.matmul %39, %40, %cst_23 {dimension_numbers = #tpu.dot_dimension_numbers<[1], [1], [0], [0], [0, 0, 1, 0], [], []>} : vector<16x128xbf16>, vector<16x128xbf16>, vector<16x16xf32> -> vector<16x16xf32>
    %42 = tpu.iota {dimensions = array<i32: 1>} : vector<16x16xi32>
    %43 = vector.broadcast %1 : i32 to vector<16x16xi32>
    %44 = arith.cmpi slt, %42, %43 : vector<16x16xi32>
    %cst_24 = arith.constant -1.000000e+30 : f32
    %45 = vector.broadcast %cst_24 : f32 to vector<16x16xf32>
    %46 = arith.select %44, %41, %45 : vector<16x16xi1>, vector<16x16xf32>
    %cst_25 = arith.constant dense<0xFF800000> : vector<16xf32>
    %47 = vector.multi_reduction <maximumf>, %46, %cst_25 [1] : vector<16x16xf32> to vector<16xf32>
    %48 = vector.shape_cast %47 : vector<16xf32> to vector<16x1xf32>
    %49 = vector.broadcast %48 : vector<16x1xf32> to vector<16x16xf32>
    %50 = arith.subf %46, %49 : vector<16x16xf32>
    %51 = math.exp %50 : vector<16x16xf32>
    %cst_26 = arith.constant dense<0.000000e+00> : vector<16xf32>
    %52 = vector.multi_reduction <add>, %51, %cst_26 [1] : vector<16x16xf32> to vector<16xf32>
    %53 = vector.shape_cast %52 : vector<16xf32> to vector<16x1xf32>
    %54 = tpu.reciprocal %53 {approx = true} : vector<16x1xf32> -> vector<16x1xf32>
    %55 = vector.broadcast %54 : vector<16x1xf32> to vector<16x16xf32>
    %56 = arith.mulf %51, %55 : vector<16x16xf32>
    %57 = arith.truncf %56 : vector<16x16xf32> to vector<16x16xbf16>
    %58 = arith.truncf %38 : vector<16x128xf32> to vector<16x128xbf16>
    %cst_27 = arith.constant dense<0.000000e+00> : vector<16x128xf32>
    %59 = tpu.matmul %57, %58, %cst_27 {dimension_numbers = #tpu.dot_dimension_numbers<[1], [0], [0], [1], [0, 0, 1, 1], [], []>} : vector<16x16xbf16>, vector<16x128xbf16>, vector<16x128xf32> -> vector<16x128xf32>
    %60 = arith.truncf %59 : vector<16x128xf32> to vector<16x128xbf16>
    %c0_28 = arith.constant 0 : index
    %c0_29 = arith.constant 0 : index
    %61 = vector.load %arg10[%c0_28, %c0_29] : memref<128x128xbf16, #tpu.memory_space<vmem>>, vector<128x128xbf16>
    %cst_30 = arith.constant dense<0.000000e+00> : vector<16x128xf32>
    %62 = tpu.matmul %60, %61, %cst_30 {dimension_numbers = #tpu.dot_dimension_numbers<[1], [0], [0], [1], [0, 0, 1, 1], [], []>} : vector<16x128xbf16>, vector<128x128xbf16>, vector<16x128xf32> -> vector<16x128xf32>
    %c0_31 = arith.constant 0 : index
    %c0_32 = arith.constant 0 : index
    %63 = vector.load %arg11[%c0_31, %c0_32] : memref<1x128xf32, #tpu.memory_space<vmem>>, vector<1x128xf32>
    %64 = vector.broadcast %63 : vector<1x128xf32> to vector<16x128xf32>
    %65 = arith.addf %62, %64 : vector<16x128xf32>
    %cst_33 = arith.constant 0.000000e+00 : f32
    %66 = vector.broadcast %cst_33 : f32 to vector<16x128xf32>
    %67 = arith.maximumf %65, %66 : vector<16x128xf32>
    %c0_34 = arith.constant 0 : index
    %c0_35 = arith.constant 0 : index
    %68 = vector.load %arg12[%c0_34, %c0_35] : memref<128x128xbf16, #tpu.memory_space<vmem>>, vector<128x128xbf16>
    %cst_36 = arith.constant dense<0.000000e+00> : vector<16x128xf32>
    %69 = tpu.matmul %32, %68, %cst_36 {dimension_numbers = #tpu.dot_dimension_numbers<[1], [0], [0], [1], [0, 0, 1, 1], [], []>} : vector<16x128xbf16>, vector<128x128xbf16>, vector<16x128xf32> -> vector<16x128xf32>
    %70 = arith.truncf %67 : vector<16x128xf32> to vector<16x128xbf16>
    %c0_37 = arith.constant 0 : index
    %c0_38 = arith.constant 0 : index
    %71 = vector.load %arg13[%c0_37, %c0_38] : memref<128x128xbf16, #tpu.memory_space<vmem>>, vector<128x128xbf16>
    %cst_39 = arith.constant dense<0.000000e+00> : vector<16x128xf32>
    %72 = tpu.matmul %70, %71, %cst_39 {dimension_numbers = #tpu.dot_dimension_numbers<[1], [0], [0], [1], [0, 0, 1, 1], [], []>} : vector<16x128xbf16>, vector<128x128xbf16>, vector<16x128xf32> -> vector<16x128xf32>
    %73 = arith.addf %69, %72 : vector<16x128xf32>
    %c0_40 = arith.constant 0 : index
    %c0_41 = arith.constant 0 : index
    %74 = vector.load %arg14[%c0_40, %c0_41] : memref<1x128xf32, #tpu.memory_space<vmem>>, vector<1x128xf32>
    %75 = vector.broadcast %74 : vector<1x128xf32> to vector<16x128xf32>
    %76 = arith.addf %73, %75 : vector<16x128xf32>
    %77 = arith.negf %76 : vector<16x128xf32>
    %78 = math.exp %77 : vector<16x128xf32>
    %cst_42 = arith.constant 1.000000e+00 : f32
    %79 = vector.broadcast %cst_42 : f32 to vector<16x128xf32>
    %80 = arith.addf %79, %78 : vector<16x128xf32>
    %81 = arith.divf %79, %80 : vector<16x128xf32>
    %82 = arith.mulf %81, %31 : vector<16x128xf32>
    %cst_43 = arith.constant 1.000000e+00 : f32
    %83 = vector.broadcast %cst_43 : f32 to vector<16x128xf32>
    %84 = arith.subf %83, %81 : vector<16x128xf32>
    %85 = arith.mulf %84, %67 : vector<16x128xf32>
    %86 = arith.addf %82, %85 : vector<16x128xf32>
    %87 = tpu.iota {dimensions = array<i32: 0>} : vector<16x1xi32>
    %88 = vector.broadcast %1 : i32 to vector<16x1xi32>
    %89 = arith.cmpi slt, %87, %88 : vector<16x1xi32>
    %cst_44 = arith.constant 0.000000e+00 : f32
    %90 = vector.shape_cast %89 : vector<16x1xi1> to vector<16x1xi1>
    %91 = vector.broadcast %90 : vector<16x1xi1> to vector<16x128xi1>
    %92 = vector.broadcast %cst_44 : f32 to vector<16x128xf32>
    %93 = arith.select %91, %86, %92 : vector<16x128xi1>, vector<16x128xf32>
    %c0_45 = arith.constant 0 : index
    %c0_46 = arith.constant 0 : index
    %c0_47 = arith.constant 0 : index
    %94 = vector.load %arg15[%c0_45, %c0_46, %c0_47] : memref<1x16x128xf32, #tpu.memory_space<vmem>>, vector<1x16x128xf32>
    %95 = vector.shape_cast %94 : vector<1x16x128xf32> to vector<16x128xf32>
    %96 = vector.shape_cast %93 : vector<16x128xf32> to vector<1x16x128xf32>
    tpu.vector_store %arg15[%c0_45, %c0_46, %c0_47], %96 {strides = array<i32>} : memref<1x16x128xf32, #tpu.memory_space<vmem>>, vector<1x16x128xf32>,
    return
  }
  func.func @transform_0(%arg0: i32, %arg1: memref<8xi32, #tpu.memory_space<smem>>) -> (i32, i32, i32) {
    %c0_i32 = arith.constant 0 : i32
    %c0_i32_0 = arith.constant 0 : i32
    %c0_i32_1 = arith.constant 0 : i32
    return %arg0, %c0_i32, %c0_i32_0 : i32, i32, i32
  }
  func.func @transform_1(%arg0: i32, %arg1: memref<8xi32, #tpu.memory_space<smem>>) -> (i32, i32, i32) {
    %c0_i32 = arith.constant 0 : i32
    %c0_i32_0 = arith.constant 0 : i32
    %c0_i32_1 = arith.constant 0 : i32
    return %arg0, %c0_i32, %c0_i32_0 : i32, i32, i32
  }
  func.func @transform_2(%arg0: i32, %arg1: memref<8xi32, #tpu.memory_space<smem>>) -> (i32, i32) {
    %c0_i32 = arith.constant 0 : i32
    %c0_i32_0 = arith.constant 0 : i32
    %c0_i32_1 = arith.constant 0 : i32
    return %c0_i32, %c0_i32_0 : i32, i32
  }
  func.func @transform_3(%arg0: i32, %arg1: memref<8xi32, #tpu.memory_space<smem>>) -> (i32, i32) {
    %c0_i32 = arith.constant 0 : i32
    %c0_i32_0 = arith.constant 0 : i32
    %c0_i32_1 = arith.constant 0 : i32
    return %c0_i32, %c0_i32_0 : i32, i32
  }
  func.func @transform_4(%arg0: i32, %arg1: memref<8xi32, #tpu.memory_space<smem>>) -> (i32, i32) {
    %c0_i32 = arith.constant 0 : i32
    %c0_i32_0 = arith.constant 0 : i32
    %c0_i32_1 = arith.constant 0 : i32
    return %c0_i32, %c0_i32_0 : i32, i32
  }
  func.func @transform_5(%arg0: i32, %arg1: memref<8xi32, #tpu.memory_space<smem>>) -> (i32, i32) {
    %c0_i32 = arith.constant 0 : i32
    %c0_i32_0 = arith.constant 0 : i32
    %c0_i32_1 = arith.constant 0 : i32
    return %c0_i32, %c0_i32_0 : i32, i32
  }
  func.func @transform_6(%arg0: i32, %arg1: memref<8xi32, #tpu.memory_space<smem>>) -> (i32, i32) {
    %c0_i32 = arith.constant 0 : i32
    %c0_i32_0 = arith.constant 0 : i32
    %c0_i32_1 = arith.constant 0 : i32
    return %c0_i32, %c0_i32_0 : i32, i32
  }
  func.func @transform_7(%arg0: i32, %arg1: memref<8xi32, #tpu.memory_space<smem>>) -> (i32, i32) {
    %c0_i32 = arith.constant 0 : i32
    %c0_i32_0 = arith.constant 0 : i32
    %c0_i32_1 = arith.constant 0 : i32
    return %c0_i32, %c0_i32_0 : i32, i32
  }
  func.func @transform_8(%arg0: i32, %arg1: memref<8xi32, #tpu.memory_space<smem>>) -> (i32, i32) {
    %c0_i32 = arith.constant 0 : i32
    %c0_i32_0 = arith.constant 0 : i32
    %c0_i32_1 = arith.constant 0 : i32
    return %c0_i32, %c0_i32_0 : i32, i32
  }
  func.func @transform_9(%arg0: i32, %arg1: memref<8xi32, #tpu.memory_space<smem>>) -> (i32, i32) {
    %c0_i32 = arith.constant 0 : i32
    %c0_i32_0 = arith.constant 0 : i32
    %c0_i32_1 = arith.constant 0 : i32
    return %c0_i32, %c0_i32_0 : i32, i32
  }
  func.func @transform_10(%arg0: i32, %arg1: memref<8xi32, #tpu.memory_space<smem>>) -> (i32, i32) {
    %c0_i32 = arith.constant 0 : i32
    %c0_i32_0 = arith.constant 0 : i32
    %c0_i32_1 = arith.constant 0 : i32
    return %c0_i32, %c0_i32_0 : i32, i32
  }
  func.func @transform_11(%arg0: i32, %arg1: memref<8xi32, #tpu.memory_space<smem>>) -> (i32, i32) {
    %c0_i32 = arith.constant 0 : i32
    %c0_i32_0 = arith.constant 0 : i32
    %c0_i32_1 = arith.constant 0 : i32
    return %c0_i32, %c0_i32_0 : i32, i32
  }
  func.func @transform_12(%arg0: i32, %arg1: memref<8xi32, #tpu.memory_space<smem>>) -> (i32, i32) {
    %c0_i32 = arith.constant 0 : i32
    %c0_i32_0 = arith.constant 0 : i32
    %c0_i32_1 = arith.constant 0 : i32
    return %c0_i32, %c0_i32_0 : i32, i32
  }
  func.func @transform_13(%arg0: i32, %arg1: memref<8xi32, #tpu.memory_space<smem>>) -> (i32, i32, i32) {
    %c0_i32 = arith.constant 0 : i32
    %c0_i32_0 = arith.constant 0 : i32
    %c0_i32_1 = arith.constant 0 : i32
    return %arg0, %c0_i32, %c0_i32_0 : i32, i32, i32
  }
}

</mosaic_0001>

<llo_original>
// kernel: tpu_custom_call.1
$region0: #{tpu_custom_call.1}
  #allocation0 [shape = 'u32[]', space=smem, size = 0x4, offset = 0x4, fixed_abs, tag = 'smem constant byte address 0x4 - core index']
  #allocation1 [shape = 'u32[72,128]{1,0:T(1,128)}', space=vmem, size = 0x9000, scoped, tag = 'internal scratch']
  #allocation2 [shape = 's32[1]{0}', space=sflag, size = 0x4, scoped, tag = 'scoped memory for tpu_custom_call.1']
  #allocation3 [shape = 'u8[512]{0}', space=smem, size = 0x200, scoped, tag = 'prefetched SMEM operand 0']
  %s0 = inlined_call_operand.vmem [shape: s32[8], index: 0, kind: input, shape index: {}]
  %s1 = inlined_call_operand.vmem [shape: s32[8,16,2], index: 1, kind: input, shape index: {}]
  %s2 = inlined_call_operand.vmem [shape: bf16[8,16,64], index: 2, kind: input, shape index: {}]
  %s3 = inlined_call_operand.vmem [shape: bf16[8,128], index: 3, kind: input, shape index: {}]
  %s4 = inlined_call_operand.hbm [shape: bf16[64,128], index: 4, kind: input, shape index: {}]
  %s5 = inlined_call_operand.vmem [shape: f32[1,128], index: 5, kind: input, shape index: {}]
  %s6 = inlined_call_operand.vmem [shape: bf16[128,128], index: 6, kind: input, shape index: {}]
  %s7 = inlined_call_operand.hbm [shape: bf16[128,128], index: 7, kind: input, shape index: {}]
  %s8 = inlined_call_operand.hbm [shape: bf16[128,128], index: 8, kind: input, shape index: {}]
  %s9 = inlined_call_operand.hbm [shape: bf16[128,128], index: 9, kind: input, shape index: {}]
  %s10 = inlined_call_operand.vmem [shape: f32[1,128], index: 10, kind: input, shape index: {}]
  %s11 = inlined_call_operand.hbm [shape: bf16[128,128], index: 11, kind: input, shape index: {}]
  %s12 = inlined_call_operand.hbm [shape: bf16[128,128], index: 12, kind: input, shape index: {}]
  %s13 = inlined_call_operand.vmem [shape: f32[1,128], index: 13, kind: input, shape index: {}]
  %s14 = inlined_call_operand.hbm [shape: f32[8,16,128], index: 14, kind: output, shape index: {}]
  %s15 = sld [smem:[#allocation0]]
  $region109: #{tpu_custom_call.1} parent=0
    _
  %s17 = ssub.s32 1, %s15
  %s18 = scalar_select 0, %s17, %s15
  %s20 = sshll.u32 %s0, 4
  %s21 = int_to_ptr.vmem [resolvable:$true] %s20
  %23 = dma.vmem_to_smem %s21, 16, [#allocation3], [#allocation2]
  %25 = dma.done [#allocation2], 16
  %26 = sfence
  $region1: #{tpu_custom_call.1} parent=0
    #allocation4 [shape = 'u8[16384]{0}', space=vmem, size = 0x4000, scoped, tag = 'input window, operand 4, single buffered']
    #allocation5 [shape = 's32[2]{0}', space=sflag, size = 0x8, scoped, tag = 'scoped memory for tpu_custom_call.1']
    #allocation6 [shape = 's32[2]{0}', space=sflag, size = 0x8, scoped, tag = 'scoped memory for tpu_custom_call.1']
    #allocation7 [shape = 'u8[32768]{0}', space=vmem, size = 0x8000, scoped, tag = 'input window, operand 7, single buffered']
    #allocation8 [shape = 's32[1]{0}', space=sflag, size = 0x4, scoped, tag = 'scoped memory for tpu_custom_call.1']
    #allocation9 [shape = 'u8[32768]{0}', space=vmem, size = 0x8000, scoped, tag = 'input window, operand 8, single buffered']
    #allocation10 [shape = 'u8[32768]{0}', space=vmem, size = 0x8000, scoped, tag = 'input window, operand 9, single buffered']
    #allocation11 [shape = 's32[1]{0}', space=sflag, size = 0x4, scoped, tag = 'scoped memory for tpu_custom_call.1']
    #allocation12 [shape = 'u8[32768]{0}', space=vmem, size = 0x8000, scoped, tag = 'input window, operand 11, single buffered']
    #allocation13 [shape = 'u8[32768]{0}', space=vmem, size = 0x8000, scoped, tag = 'input window, operand 12, single buffered']
    #allocation14 [shape = 's32[1]{0}', space=sflag, size = 0x4, scoped, tag = 'scoped memory for tpu_custom_call.1']
    #allocation15 [shape = 'u8[16384]{0}', space=vmem, size = 0x4000, scoped, tag = 'output window, operand 0']
    %27 = vsyncpa [#allocation5], 0
    %28 = vsyncpa [#allocation8], 0
    %29 = vsyncpa [#allocation11], 0
    %30 = vsyncpa [#allocation14], 0
    %31 = vsyncpa [#allocation6], 0
    %s32 = scalar_lea.sflag [#allocation6], 1
    %33 = vsyncpa %s32, 0
    loop: start=0, step=1, limit=10
    $region2: #{tpu_custom_call.1} parent=1 // loop_pre_header
      _
    $region3: #{tpu_custom_call.1} parent=1 // loop_header
      %s35 = sphi 0, %s39
      %p36 = scmp.ge.s32.totalorder %s35, 10
      %s45 = sphi 0, %s47
      %s48 = sphi 0, %s45
      %s49 = sphi 0, %s48
      %s65 = sphi 0, %s49
      %s71 = sphi 0, %s73
      %s74 = sphi 0, %s71
      %s75 = sphi 0, %s74
      %s91 = sphi 0, %s75
      %s95 = sphi 0, %s95
      %s97 = sphi 0, %s95
      %s98 = sphi 0, %s97
      %s112 = sphi 0, %s98
      %s116 = sphi 0, %s116
      %s118 = sphi 0, %s116
      %s119 = sphi 0, %s118
      %s133 = sphi 0, %s119
      %s137 = sphi 0, %s137
      %s139 = sphi 0, %s137
      %s140 = sphi 0, %s139
      %s154 = sphi 0, %s140
      %s158 = sphi 0, %s158
      %s160 = sphi 0, %s158
      %s161 = sphi 0, %s160
      %s175 = sphi 0, %s161
      %s179 = sphi 0, %s179
      %s181 = sphi 0, %s179
      %s182 = sphi 0, %s181
      %s196 = sphi 0, %s182
      %s200 = sphi 0, %s200
      %s202 = sphi 0, %s200
      %s203 = sphi 0, %s202
      %s217 = sphi 0, %s203
      %s221 = sphi 0, %s221
      %s223 = sphi 0, %s221
      %s224 = sphi 0, %s223
      %s238 = sphi 0, %s224
      %s242 = sphi 0, %s242
      %s244 = sphi 0, %s242
      %s245 = sphi 0, %s244
      %s259 = sphi 0, %s245
      %s263 = sphi 0, %s263
      %s265 = sphi 0, %s263
      %s266 = sphi 0, %s265
      %s280 = sphi 0, %s266
      %s284 = sphi 0, %s284
      %s286 = sphi 0, %s284
      %s287 = sphi 0, %s286
      %s301 = sphi 0, %s287
      %s305 = sphi 0, %s305
      %s307 = sphi 0, %s305
      %s308 = sphi 0, %s307
      %s322 = sphi 0, %s308
      %s328 = sphi 0, %s330
      %s331 = sphi 0, %s328
      %s332 = sphi 0, %s331
      %s348 = sphi 0, %s332
    $region4: #{tpu_custom_call.1} parent=1 // loop_header_branch
      %38 = sbr.rel (%p36) target = $region8
    $region5: #{tpu_custom_call.1} parent=1 // loop_body
      %s40 = ssub.s32 %s35, 1
      %s41 = ssub.s32 %s35, 2
      %s42 = sadd.s32 %s35, 1
      %s43 = ssub.s32 %s35, %s42
      %p44 = scmp.eq.s32.totalorder %s43, 0
      %s46 = sadd.s32 %s45, 1
      %s47 = scalar_select %p44, %s45, %s46
      %p50 = pneg %p44
      %p51 = scmp.eq.s32.totalorder %s35, 7
      %p52 = por %p50, %p51
      %p53 = scmp.ne.s32.totalorder %s45, %s48
      %p54 = scmp.eq.s32.totalorder %s35, 0
      %p55 = por %p53, %p54
      %p56 = scmp.ne.s32.totalorder %s45, %s48
      %p57 = scmp.eq.s32.totalorder %s40, 7
      %p58 = por %p56, %p57
      %p59 = scmp.ne.s32.totalorder %s48, %s49
      %p60 = scmp.eq.s32.totalorder %s40, 0
      %p61 = por %p59, %p60
      %p62 = scmp.ne.s32.totalorder %s48, %s49
      %p63 = scmp.eq.s32.totalorder %s41, 7
      %p64 = por %p62, %p63
      %p66 = scmp.ne.s32.totalorder %s49, %s65
      %p67 = scmp.eq.s32.totalorder %s41, 0
      %p68 = por %p66, %p67
      %s69 = ssub.s32 %s35, %s42
      %p70 = scmp.eq.s32.totalorder %s69, 0
      %s72 = sadd.s32 %s71, 1
      %s73 = scalar_select %p70, %s71, %s72
      %p76 = pneg %p70
      %p77 = scmp.eq.s32.totalorder %s35, 7
      %p78 = por %p76, %p77
      %p79 = scmp.ne.s32.totalorder %s71, %s74
      %p80 = scmp.eq.s32.totalorder %s35, 0
      %p81 = por %p79, %p80
      %p82 = scmp.ne.s32.totalorder %s71, %s74
      %p83 = scmp.eq.s32.totalorder %s40, 7
      %p84 = por %p82, %p83
      %p85 = scmp.ne.s32.totalorder %s74, %s75
      %p86 = scmp.eq.s32.totalorder %s40, 0
      %p87 = por %p85, %p86
      %p88 = scmp.ne.s32.totalorder %s74, %s75
      %p89 = scmp.eq.s32.totalorder %s41, 7
      %p90 = por %p88, %p89
      %p92 = scmp.ne.s32.totalorder %s75, %s91
      %p93 = scmp.eq.s32.totalorder %s41, 0
      %p94 = por %p92, %p93
      %s96 = sadd.s32 %s95, 1
      %p99 = scmp.eq.s32.totalorder %s35, 7
      %p100 = scmp.ne.s32.totalorder %s95, %s97
      %p101 = scmp.eq.s32.totalorder %s35, 0
      %p102 = por %p100, %p101
      %p103 = scmp.ne.s32.totalorder %s95, %s97
      %p104 = scmp.eq.s32.totalorder %s40, 7
      %p105 = por %p103, %p104
      %p106 = scmp.ne.s32.totalorder %s97, %s98
      %p107 = scmp.eq.s32.totalorder %s40, 0
      %p108 = por %p106, %p107
      %p109 = scmp.ne.s32.totalorder %s97, %s98
      %p110 = scmp.eq.s32.totalorder %s41, 7
      %p111 = por %p109, %p110
      %p113 = scmp.ne.s32.totalorder %s98, %s112
      %p114 = scmp.eq.s32.totalorder %s41, 0
      %p115 = por %p113, %p114
      %s117 = sadd.s32 %s116, 1
      %p120 = scmp.eq.s32.totalorder %s35, 7
      %p121 = scmp.ne.s32.totalorder %s116, %s118
      %p122 = scmp.eq.s32.totalorder %s35, 0
      %p123 = por %p121, %p122
      %p124 = scmp.ne.s32.totalorder %s116, %s118
      %p125 = scmp.eq.s32.totalorder %s40, 7
      %p126 = por %p124, %p125
      %p127 = scmp.ne.s32.totalorder %s118, %s119
      %p128 = scmp.eq.s32.totalorder %s40, 0
      %p129 = por %p127, %p128
      %p130 = scmp.ne.s32.totalorder %s118, %s119
      %p131 = scmp.eq.s32.totalorder %s41, 7
      %p132 = por %p130, %p131
      %p134 = scmp.ne.s32.totalorder %s119, %s133
      %p135 = scmp.eq.s32.totalorder %s41, 0
      %p136 = por %p134, %p135
      %s138 = sadd.s32 %s137, 1
      %p141 = scmp.eq.s32.totalorder %s35, 7
      %p142 = scmp.ne.s32.totalorder %s137, %s139
      %p143 = scmp.eq.s32.totalorder %s35, 0
      %p144 = por %p142, %p143
      %p145 = scmp.ne.s32.totalorder %s137, %s139
      %p146 = scmp.eq.s32.totalorder %s40, 7
      %p147 = por %p145, %p146
      %p148 = scmp.ne.s32.totalorder %s139, %s140
      %p149 = scmp.eq.s32.totalorder %s40, 0
      %p150 = por %p148, %p149
      %p151 = scmp.ne.s32.totalorder %s139, %s140
      %p152 = scmp.eq.s32.totalorder %s41, 7
      %p153 = por %p151, %p152
      %p155 = scmp.ne.s32.totalorder %s140, %s154
      %p156 = scmp.eq.s32.totalorder %s41, 0
      %p157 = por %p155, %p156
      %s159 = sadd.s32 %s158, 1
      %p162 = scmp.eq.s32.totalorder %s35, 7
      %p163 = scmp.ne.s32.totalorder %s158, %s160
      %p164 = scmp.eq.s32.totalorder %s35, 0
      %p165 = por %p163, %p164
      %p166 = scmp.ne.s32.totalorder %s158, %s160
      %p167 = scmp.eq.s32.totalorder %s40, 7
      %p168 = por %p166, %p167
      %p169 = scmp.ne.s32.totalorder %s160, %s161
      %p170 = scmp.eq.s32.totalorder %s40, 0
      %p171 = por %p169, %p170
      %p172 = scmp.ne.s32.totalorder %s160, %s161
      %p173 = scmp.eq.s32.totalorder %s41, 7
      %p174 = por %p172, %p173
      %p176 = scmp.ne.s32.totalorder %s161, %s175
      %p177 = scmp.eq.s32.totalorder %s41, 0
      %p178 = por %p176, %p177
      %s180 = sadd.s32 %s179, 1
      %p183 = scmp.eq.s32.totalorder %s35, 7
      %p184 = scmp.ne.s32.totalorder %s179, %s181
      %p185 = scmp.eq.s32.totalorder %s35, 0
      %p186 = por %p184, %p185
      %p187 = scmp.ne.s32.totalorder %s179, %s181
      %p188 = scmp.eq.s32.totalorder %s40, 7
      %p189 = por %p187, %p188
      %p190 = scmp.ne.s32.totalorder %s181, %s182
      %p191 = scmp.eq.s32.totalorder %s40, 0
      %p192 = por %p190, %p191
      %p193 = scmp.ne.s32.totalorder %s181, %s182
      %p194 = scmp.eq.s32.totalorder %s41, 7
      %p195 = por %p193, %p194
      %p197 = scmp.ne.s32.totalorder %s182, %s196
      %p198 = scmp.eq.s32.totalorder %s41, 0
      %p199 = por %p197, %p198
      %s201 = sadd.s32 %s200, 1
      %p204 = scmp.eq.s32.totalorder %s35, 7
      %p205 = scmp.ne.s32.totalorder %s200, %s202
      %p206 = scmp.eq.s32.totalorder %s35, 0
      %p207 = por %p205, %p206
      %p208 = scmp.ne.s32.totalorder %s200, %s202
      %p209 = scmp.eq.s32.totalorder %s40, 7
      %p210 = por %p208, %p209
      %p211 = scmp.ne.s32.totalorder %s202, %s203
      %p212 = scmp.eq.s32.totalorder %s40, 0
      %p213 = por %p211, %p212
      %p214 = scmp.ne.s32.totalorder %s202, %s203
      %p215 = scmp.eq.s32.totalorder %s41, 7
      %p216 = por %p214, %p215
      %p218 = scmp.ne.s32.totalorder %s203, %s217
      %p219 = scmp.eq.s32.totalorder %s41, 0
      %p220 = por %p218, %p219
      %s222 = sadd.s32 %s221, 1
      %p225 = scmp.eq.s32.totalorder %s35, 7
      %p226 = scmp.ne.s32.totalorder %s221, %s223
      %p227 = scmp.eq.s32.totalorder %s35, 0
      %p228 = por %p226, %p227
      %p229 = scmp.ne.s32.totalorder %s221, %s223
      %p230 = scmp.eq.s32.totalorder %s40, 7
      %p231 = por %p229, %p230
      %p232 = scmp.ne.s32.totalorder %s223, %s224
      %p233 = scmp.eq.s32.totalorder %s40, 0
      %p234 = por %p232, %p233
      %p235 = scmp.ne.s32.totalorder %s223, %s224
      %p236 = scmp.eq.s32.totalorder %s41, 7
      %p237 = por %p235, %p236
      %p239 = scmp.ne.s32.totalorder %s224, %s238
      %p240 = scmp.eq.s32.totalorder %s41, 0
      %p241 = por %p239, %p240
      %s243 = sadd.s32 %s242, 1
      %p246 = scmp.eq.s32.totalorder %s35, 7
      %p247 = scmp.ne.s32.totalorder %s242, %s244
      %p248 = scmp.eq.s32.totalorder %s35, 0
      %p249 = por %p247, %p248
      %p250 = scmp.ne.s32.totalorder %s242, %s244
      %p251 = scmp.eq.s32.totalorder %s40, 7
      %p252 = por %p250, %p251
      %p253 = scmp.ne.s32.totalorder %s244, %s245
      %p254 = scmp.eq.s32.totalorder %s40, 0
      %p255 = por %p253, %p254
      %p256 = scmp.ne.s32.totalorder %s244, %s245
      %p257 = scmp.eq.s32.totalorder %s41, 7
      %p258 = por %p256, %p257
      %p260 = scmp.ne.s32.totalorder %s245, %s259
      %p261 = scmp.eq.s32.totalorder %s41, 0
      %p262 = por %p260, %p261
      %s264 = sadd.s32 %s263, 1
      %p267 = scmp.eq.s32.totalorder %s35, 7
      %p268 = scmp.ne.s32.totalorder %s263, %s265
      %p269 = scmp.eq.s32.totalorder %s35, 0
      %p270 = por %p268, %p269
      %p271 = scmp.ne.s32.totalorder %s263, %s265
      %p272 = scmp.eq.s32.totalorder %s40, 7
      %p273 = por %p271, %p272
      %p274 = scmp.ne.s32.totalorder %s265, %s266
      %p275 = scmp.eq.s32.totalorder %s40, 0
      %p276 = por %p274, %p275
      %p277 = scmp.ne.s32.totalorder %s265, %s266
      %p278 = scmp.eq.s32.totalorder %s41, 7
      %p279 = por %p277, %p278
      %p281 = scmp.ne.s32.totalorder %s266, %s280
      %p282 = scmp.eq.s32.totalorder %s41, 0
      %p283 = por %p281, %p282
      %s285 = sadd.s32 %s284, 1
      %p288 = scmp.eq.s32.totalorder %s35, 7
      %p289 = scmp.ne.s32.totalorder %s284, %s286
      %p290 = scmp.eq.s32.totalorder %s35, 0
      %p291 = por %p289, %p290
      %p292 = scmp.ne.s32.totalorder %s284, %s286
      %p293 = scmp.eq.s32.totalorder %s40, 7
      %p294 = por %p292, %p293
      %p295 = scmp.ne.s32.totalorder %s286, %s287
      %p296 = scmp.eq.s32.totalorder %s40, 0
      %p297 = por %p295, %p296
      %p298 = scmp.ne.s32.totalorder %s286, %s287
      %p299 = scmp.eq.s32.totalorder %s41, 7
      %p300 = por %p298, %p299
      %p302 = scmp.ne.s32.totalorder %s287, %s301
      %p303 = scmp.eq.s32.totalorder %s41, 0
      %p304 = por %p302, %p303
      %s306 = sadd.s32 %s305, 1
      %p309 = scmp.eq.s32.totalorder %s35, 7
      %p310 = scmp.ne.s32.totalorder %s305, %s307
      %p311 = scmp.eq.s32.totalorder %s35, 0
      %p312 = por %p310, %p311
      %p313 = scmp.ne.s32.totalorder %s305, %s307
      %p314 = scmp.eq.s32.totalorder %s40, 7
      %p315 = por %p313, %p314
      %p316 = scmp.ne.s32.totalorder %s307, %s308
      %p317 = scmp.eq.s32.totalorder %s40, 0
      %p318 = por %p316, %p317
      %p319 = scmp.ne.s32.totalorder %s307, %s308
      %p320 = scmp.eq.s32.totalorder %s41, 7
      %p321 = por %p319, %p320
      %p323 = scmp.ne.s32.totalorder %s308, %s322
      %p324 = scmp.eq.s32.totalorder %s41, 0
      %p325 = por %p323, %p324
      %s326 = ssub.s32 %s35, %s42
      %p327 = scmp.eq.s32.totalorder %s326, 0
      %s329 = sadd.s32 %s328, 1
      %s330 = scalar_select %p327, %s328, %s329
      %p333 = pneg %p327
      %p334 = scmp.eq.s32.totalorder %s35, 7
      %p335 = por %p333, %p334
      %p336 = scmp.ne.s32.totalorder %s328, %s331
      %p337 = scmp.eq.s32.totalorder %s35, 0
      %p338 = por %p336, %p337
      %p339 = scmp.ne.s32.totalorder %s328, %s331
      %p340 = scmp.eq.s32.totalorder %s40, 7
      %p341 = por %p339, %p340
      %p342 = scmp.ne.s32.totalorder %s331, %s332
      %p343 = scmp.eq.s32.totalorder %s40, 0
      %p344 = por %p342, %p343
      %p345 = scmp.ne.s32.totalorder %s331, %s332
      %p346 = scmp.eq.s32.totalorder %s41, 7
      %p347 = por %p345, %p346
      %p349 = scmp.ne.s32.totalorder %s332, %s348
      %p350 = scmp.eq.s32.totalorder %s41, 0
      %p351 = por %p349, %p350
      %p352 = scmp.le.s32.totalorder 1, %s35
      %p353 = scmp.lt.s32.totalorder %s35, 9
      %p354 = pnand %p352, %p353
      %p355 = pneg %p354
      // Predicated region
      $region9: #{tpu_custom_call.1} parent=5 // pred_check
        _
      $region10: #{tpu_custom_call.1} parent=5 // pred_check_branch
        %357 = sbr.rel (%p354) target = $region12
      $region11: #{tpu_custom_call.1} parent=5 // pred_region
        %s358 = ssub.s32 %s35, 1
        // Predicated region
        $region13: #{tpu_custom_call.1} parent=11 // pred_check
          %p359 = pneg %p108
        $region14: #{tpu_custom_call.1} parent=11 // pred_check_branch
          %361 = sbr.rel (%p359) target = $region16
        $region15: #{tpu_custom_call.1} parent=11 // pred_region
          _
        $region16: #{tpu_custom_call.1} parent=11 // pred_fallthru
          _
        // Predicated region
        $region17: #{tpu_custom_call.1} parent=11 // pred_check
          %p362 = pneg %p129
        $region18: #{tpu_custom_call.1} parent=11 // pred_check_branch
          %364 = sbr.rel (%p362) target = $region20
        $region19: #{tpu_custom_call.1} parent=11 // pred_region
          %366 = vsyncadd [#allocation5], 0
          %s367 = sshll.u32 %s4, 4
          %s368 = int_to_ptr.hbm [resolvable:$true] %s367
          %s369 = sshll.u32 [#allocation4], 4
          %s370 = int_to_ptr.vmem [resolvable:$true] %s369
          %375 = dma.hbm_to_vmem [thread:$0]  %s368, 512, %s370, [#allocation5], 64, 64, 4
        $region20: #{tpu_custom_call.1} parent=11 // pred_fallthru
          _
        // Predicated region
        $region21: #{tpu_custom_call.1} parent=11 // pred_check
          %p376 = pneg %p150
        $region22: #{tpu_custom_call.1} parent=11 // pred_check_branch
          %378 = sbr.rel (%p376) target = $region24
        $region23: #{tpu_custom_call.1} parent=11 // pred_region
          _
        $region24: #{tpu_custom_call.1} parent=11 // pred_fallthru
          _
        // Predicated region
        $region25: #{tpu_custom_call.1} parent=11 // pred_check
          %p379 = pneg %p171
        $region26: #{tpu_custom_call.1} parent=11 // pred_check_branch
          %381 = sbr.rel (%p379) target = $region28
        $region27: #{tpu_custom_call.1} parent=11 // pred_region
          _
        $region28: #{tpu_custom_call.1} parent=11 // pred_fallthru
          _
        // Predicated region
        $region29: #{tpu_custom_call.1} parent=11 // pred_check
          %p382 = pneg %p192
        $region30: #{tpu_custom_call.1} parent=11 // pred_check_branch
          %384 = sbr.rel (%p382) target = $region32
        $region31: #{tpu_custom_call.1} parent=11 // pred_region
          %386 = vsyncadd [#allocation8], 0
          %s387 = sshll.u32 %s7, 4
          %s388 = int_to_ptr.hbm [resolvable:$true] %s387
          %s389 = sshll.u32 [#allocation7], 4
          %s390 = int_to_ptr.vmem [resolvable:$true] %s389
          %395 = dma.hbm_to_vmem [thread:$0]  %s388, 1024, %s390, [#allocation8], 64, 64, 4
        $region32: #{tpu_custom_call.1} parent=11 // pred_fallthru
          _
        // Predicated region
        $region33: #{tpu_custom_call.1} parent=11 // pred_check
          %p396 = pneg %p213
        $region34: #{tpu_custom_call.1} parent=11 // pred_check_branch
          %398 = sbr.rel (%p396) target = $region36
        $region35: #{tpu_custom_call.1} parent=11 // pred_region
          %400 = vsyncadd [#allocation8], 0
          %s401 = sshll.u32 %s8, 4
          %s402 = int_to_ptr.hbm [resolvable:$true] %s401
          %s403 = sshll.u32 [#allocation9], 4
          %s404 = int_to_ptr.vmem [resolvable:$true] %s403
          %409 = dma.hbm_to_vmem [thread:$0]  %s402, 1024, %s404, [#allocation8], 64, 64, 4
        $region36: #{tpu_custom_call.1} parent=11 // pred_fallthru
          _
        // Predicated region
        $region37: #{tpu_custom_call.1} parent=11 // pred_check
          %p410 = pneg %p234
        $region38: #{tpu_custom_call.1} parent=11 // pred_check_branch
          %412 = sbr.rel (%p410) target = $region40
        $region39: #{tpu_custom_call.1} parent=11 // pred_region
          %414 = vsyncadd [#allocation11], 0
          %s415 = sshll.u32 %s9, 4
          %s416 = int_to_ptr.hbm [resolvable:$true] %s415
          %s417 = sshll.u32 [#allocation10], 4
          %s418 = int_to_ptr.vmem [resolvable:$true] %s417
          %423 = dma.hbm_to_vmem [thread:$0]  %s416, 1024, %s418, [#allocation11], 64, 64, 4
        $region40: #{tpu_custom_call.1} parent=11 // pred_fallthru
          _
        // Predicated region
        $region41: #{tpu_custom_call.1} parent=11 // pred_check
          %p424 = pneg %p255
        $region42: #{tpu_custom_call.1} parent=11 // pred_check_branch
          %426 = sbr.rel (%p424) target = $region44
        $region43: #{tpu_custom_call.1} parent=11 // pred_region
          _
        $region44: #{tpu_custom_call.1} parent=11 // pred_fallthru
          _
        // Predicated region
        $region45: #{tpu_custom_call.1} parent=11 // pred_check
          %p427 = pneg %p276
        $region46: #{tpu_custom_call.1} parent=11 // pred_check_branch
          %429 = sbr.rel (%p427) target = $region48
        $region47: #{tpu_custom_call.1} parent=11 // pred_region
          %431 = vsyncadd [#allocation11], 0
          %s432 = sshll.u32 %s11, 4
          %s433 = int_to_ptr.hbm [resolvable:$true] %s432
          %s434 = sshll.u32 [#allocation12], 4
          %s435 = int_to_ptr.vmem [resolvable:$true] %s434
          %440 = dma.hbm_to_vmem [thread:$0]  %s433, 1024, %s435, [#allocation11], 64, 64, 4
        $region48: #{tpu_custom_call.1} parent=11 // pred_fallthru
          _
        // Predicated region
        $region49: #{tpu_custom_call.1} parent=11 // pred_check
          %p441 = pneg %p297
        $region50: #{tpu_custom_call.1} parent=11 // pred_check_branch
          %443 = sbr.rel (%p441) target = $region52
        $region51: #{tpu_custom_call.1} parent=11 // pred_region
          %445 = vsyncadd [#allocation14], 0
          %s446 = sshll.u32 %s12, 4
          %s447 = int_to_ptr.hbm [resolvable:$true] %s446
          %s448 = sshll.u32 [#allocation13], 4
          %s449 = int_to_ptr.vmem [resolvable:$true] %s448
          %454 = dma.hbm_to_vmem [thread:$0]  %s447, 1024, %s449, [#allocation14], 64, 64, 4
        $region52: #{tpu_custom_call.1} parent=11 // pred_fallthru
          _
        // Predicated region
        $region53: #{tpu_custom_call.1} parent=11 // pred_check
          %p455 = pneg %p318
        $region54: #{tpu_custom_call.1} parent=11 // pred_check_branch
          %457 = sbr.rel (%p455) target = $region56
        $region55: #{tpu_custom_call.1} parent=11 // pred_region
          _
        $region56: #{tpu_custom_call.1} parent=11 // pred_fallthru
          _
      $region12: #{tpu_custom_call.1} parent=5 // pred_fallthru
        _
      %p458 = scmp.lt.s32.totalorder %s35, 8
      // Predicated region
      $region57: #{tpu_custom_call.1} parent=5 // pred_check
        %p459 = pneg %p458
      $region58: #{tpu_custom_call.1} parent=5 // pred_check_branch
        %461 = sbr.rel (%p459) target = $region60
      $region59: #{tpu_custom_call.1} parent=5 // pred_region
        // Predicated region
        $region61: #{tpu_custom_call.1} parent=59 // pred_check
          %p462 = pneg %p55
        $region62: #{tpu_custom_call.1} parent=59 // pred_check_branch
          %464 = sbr.rel (%p462) target = $region64
        $region63: #{tpu_custom_call.1} parent=59 // pred_region
          %p465 = scmp.lt.s32.totalorder %s35, 7
          %s466 = scalar_select %p465, %s35, 7
          %s467 = smul.addr %s466, 2
          %s468 = smul.addr %s467, 8
          %s469 = scalar_lea.vmem %s1, %s468
        $region64: #{tpu_custom_call.1} parent=59 // pred_fallthru
          _
        // Predicated region
        $region65: #{tpu_custom_call.1} parent=59 // pred_check
          %p470 = pneg %p81
        $region66: #{tpu_custom_call.1} parent=59 // pred_check_branch
          %472 = sbr.rel (%p470) target = $region68
        $region67: #{tpu_custom_call.1} parent=59 // pred_region
          %p473 = scmp.lt.s32.totalorder %s35, 7
          %s474 = scalar_select %p473, %s35, 7
          %s475 = smul.addr %s474, 2
          %s476 = smul.addr %s475, 4
          %s477 = scalar_lea.vmem %s2, %s476
        $region68: #{tpu_custom_call.1} parent=59 // pred_fallthru
          _
      $region60: #{tpu_custom_call.1} parent=5 // pred_fallthru
        _
      %p478 = scmp.le.s32.totalorder 1, %s35
      %p479 = scmp.lt.s32.totalorder %s35, 9
      %p480 = pnand %p478, %p479
      %p481 = pneg %p480
      // Predicated region
      $region69: #{tpu_custom_call.1} parent=5 // pred_check
        _
      $region70: #{tpu_custom_call.1} parent=5 // pred_check_branch
        %483 = sbr.rel (%p480) target = $region72
      $region71: #{tpu_custom_call.1} parent=5 // pred_region
        %s484 = ssub.s32 %s35, 1
        // Predicated region
        $region73: #{tpu_custom_call.1} parent=71 // pred_check
          %p485 = pneg %p129
        $region74: #{tpu_custom_call.1} parent=71 // pred_check_branch
          %487 = sbr.rel (%p485) target = $region76
        $region75: #{tpu_custom_call.1} parent=71 // pred_region
          %489 = dma.done [#allocation5], 512
        $region76: #{tpu_custom_call.1} parent=71 // pred_fallthru
          _
        // Predicated region
        $region77: #{tpu_custom_call.1} parent=71 // pred_check
          %p490 = pneg %p192
        $region78: #{tpu_custom_call.1} parent=71 // pred_check_branch
          %492 = sbr.rel (%p490) target = $region80
        $region79: #{tpu_custom_call.1} parent=71 // pred_region
          %494 = dma.done [#allocation8], 1024
        $region80: #{tpu_custom_call.1} parent=71 // pred_fallthru
          _
        // Predicated region
        $region81: #{tpu_custom_call.1} parent=71 // pred_check
          %p495 = pneg %p213
        $region82: #{tpu_custom_call.1} parent=71 // pred_check_branch
          %497 = sbr.rel (%p495) target = $region84
        $region83: #{tpu_custom_call.1} parent=71 // pred_region
          %499 = dma.done [#allocation8], 1024
        $region84: #{tpu_custom_call.1} parent=71 // pred_fallthru
          _
        // Predicated region
        $region85: #{tpu_custom_call.1} parent=71 // pred_check
          %p500 = pneg %p234
        $region86: #{tpu_custom_call.1} parent=71 // pred_check_branch
          %502 = sbr.rel (%p500) target = $region88
        $region87: #{tpu_custom_call.1} parent=71 // pred_region
          %504 = dma.done [#allocation11], 1024
        $region88: #{tpu_custom_call.1} parent=71 // pred_fallthru
          _
        // Predicated region
        $region89: #{tpu_custom_call.1} parent=71 // pred_check
          %p505 = pneg %p276
        $region90: #{tpu_custom_call.1} parent=71 // pred_check_branch
          %507 = sbr.rel (%p505) target = $region92
        $region91: #{tpu_custom_call.1} parent=71 // pred_region
          %509 = dma.done [#allocation11], 1024
        $region92: #{tpu_custom_call.1} parent=71 // pred_fallthru
          _
        // Predicated region
        $region93: #{tpu_custom_call.1} parent=71 // pred_check
          %p510 = pneg %p297
        $region94: #{tpu_custom_call.1} parent=71 // pred_check_branch
          %512 = sbr.rel (%p510) target = $region96
        $region95: #{tpu_custom_call.1} parent=71 // pred_region
          %514 = dma.done [#allocation14], 1024
        $region96: #{tpu_custom_call.1} parent=71 // pred_fallthru
          _
        %p515 = scmp.lt.s32.totalorder %s40, 7
        %s516 = scalar_select %p515, %s40, 7
        %s517 = smul.addr %s516, 2
        %s518 = smul.addr %s517, 8
        %s519 = scalar_lea.vmem %s1, %s518
        %p520 = pneg %p61
        %p521 = pneg %p58
        %p522 = scmp.lt.s32.totalorder %s40, 7
        %s523 = scalar_select %p522, %s40, 7
        %s524 = smul.addr %s523, 2
        %s525 = smul.addr %s524, 4
        %s526 = scalar_lea.vmem %s2, %s525
        %p527 = pneg %p87
        %p528 = pneg %p84
        %p529 = pneg %p108
        %p530 = pneg %p105
        %p531 = pneg %p129
        %p532 = pneg %p126
        %p533 = pneg %p150
        %p534 = pneg %p147
        %p535 = pneg %p171
        %p536 = pneg %p168
        %p537 = pneg %p192
        %p538 = pneg %p189
        %p539 = pneg %p213
        %p540 = pneg %p210
        %p541 = pneg %p234
        %p542 = pneg %p231
        %p543 = pneg %p255
        %p544 = pneg %p252
        %p545 = pneg %p276
        %p546 = pneg %p273
        %p547 = pneg %p297
        %p548 = pneg %p294
        %p549 = pneg %p318
        %p550 = pneg %p315
        %p551 = pneg %p344
        %p552 = pneg %p341
        %s553 = sand.u32 %s331, 1
        %s554 = scalar_lea.sflag [#allocation6], %s553
        %s555 = sand.u32 %s331, 1
        %s556 = smul.addr %s555, 16
        %s557 = scalar_lea.vmem [#allocation15], %s556
        %p558 = scmp.lt.s32.totalorder %s40, 7
        %s559 = scalar_select %p558, %s40, 7
        %s560 = smul.addr %s559, 2
        %s561 = smul.addr %s560, 8
        %s562 = scalar_lea.vmem %s1, %s561
        %p563 = scmp.lt.s32.totalorder %s40, 7
        %s564 = scalar_select %p563, %s40, 7
        %s565 = smul.addr %s564, 2
        %s566 = smul.addr %s565, 4
        %s567 = scalar_lea.vmem %s2, %s566
        %s569 = sld [smem:[#allocation3 + %s40]]
        %v570 = vld [vmem:[%s562] sm:$0xff]
        %v571 = vld [vmem:[%s562 + $0x8] sm:$0xff]
        %v572 = vlaneseq
        %v573 = vand.u32 %v572, 127
        %574 = vset.pattern.permute.xlu0 0
        %575 = vperm.xlu0 %574, %v570
        %v576 = vpop.permute.xlu0 %575
        %577 = vset.pattern.permute.xlu0 0
        %578 = vperm.xlu0 %577, %v571
        %v579 = vpop.permute.xlu0 %578
        %vm580 = vcmp.eq.s32.totalorder %v573, %v576
        %vm581 = vcmp.eq.s32.totalorder %v573, %v579
        %v582 = vsel %vm580, 1, 0
        %v583 = vsel %vm581, 1, 0
        %v584 = vcvt.s32.f32 %v582
        %v585 = vcvt.s32.f32 %v583
        %v586 = vpack.c.bf16 %v585, %v584
        %v587 = vld [vmem:[%s3] sm:$0xf]
        %vm588 = vcmask 64512
        %v590 = vsel %vm588, %v586, 0
        %vm592 = vcmask 1043456
        %v594 = vsel %vm592, %v587, 0
        %596 = vmatpush.bf16.msra.mxu0 0
        %597 = vmatpush.bf16.msra.mxu0 0
        %598 = vmatpush.bf16.msra.mxu0 0
        %599 = vmatpush.bf16.msra.mxu0 0
        %600 = vmatpush.bf16.msra.mxu0 0
        %601 = vmatpush.bf16.msra.mxu0 0
        %602 = vmatpush.bf16.msra.mxu0 0
        %603 = vmatpush.bf16.msra.mxu0 %v594
        %604 = vmatmul.bf16.gmra.mxu0 %v590
        %v605 = vpop.f32.mrf.mxu0
        %v606 = vadd.f32 0.0, %v605
        %v607 = vpop.f32.mrf.mxu0
        %v608 = vadd.f32 0.0, %v607
        %609 = vdwg.mxu0
        %610 = vset.pattern.permute.xlu0 1
        %611 = vperm.xlu0 %610, %v570
        %v612 = vpop.permute.xlu0 %611
        %613 = vset.pattern.permute.xlu0 1
        %614 = vperm.xlu0 %613, %v571
        %v615 = vpop.permute.xlu0 %614
        %vm616 = vcmp.eq.s32.totalorder %v573, %v612
        %vm617 = vcmp.eq.s32.totalorder %v573, %v615
        %v618 = vsel %vm616, 1, 0
        %v619 = vsel %vm617, 1, 0
        %v620 = vcvt.s32.f32 %v618
        %v621 = vcvt.s32.f32 %v619
        %v622 = vpack.c.bf16 %v621, %v620
        %v623 = vld [vmem:[%s567] sm:$0xf]
        %v624 = vld [vmem:[%s567 + $0x4] sm:$0xf]
        %v627 = vunpack.c.l.b16 %v623
        %v628 = vunpack.c.l.b16 %v624
        %v629 = vpack.c.b16 %v628, %v627
        %vm631 = vcmask 130048
        %v633 = vsel %vm631, %v622, 0
        %635 = vmatpush.bf16.msra.mxu0 0
        %636 = vmatpush.bf16.msra.mxu0 0
        %637 = vmatpush.bf16.msra.mxu0 0
        %638 = vmatpush.bf16.msra.mxu0 0
        %639 = vmatpush.bf16.msra.mxu0 0
        %640 = vmatpush.bf16.msra.mxu0 0
        %641 = vmatpush.bf16.msra.mxu0 0
        %642 = vmatpush.bf16.msra.mxu0 %v629
        %643 = vmatmul.bf16.gmra.mxu0 %v633
        %v644 = vpop.f32.mrf.mxu0
        %v645 = vadd.f32 0.0, %v644
        %v646 = vpop.f32.mrf.mxu0
        %v647 = vadd.f32 0.0, %v646
        %648 = vdwg.mxu0
        %v649 = vpack.c.bf16 %v647, %v645
        %v650 = vld [vmem:[#allocation4] sm:$0xf]
        %v651 = vld [vmem:[#allocation4 + $0x4] sm:$0xf]
        %v652 = vld [vmem:[#allocation4 + $0x8] sm:$0xf]
        %v653 = vld [vmem:[#allocation4 + $0xc] sm:$0xf]
        %v654 = vld [vmem:[#allocation4 + $0x10] sm:$0xf]
        %v655 = vld [vmem:[#allocation4 + $0x14] sm:$0xf]
        %v656 = vld [vmem:[#allocation4 + $0x18] sm:$0xf]
        %v657 = vld [vmem:[#allocation4 + $0x1c] sm:$0xf]
        %v666 = vunpack.c.l.b16 %v650
        %v667 = vunpack.c.l.b16 %v651
        %v668 = vunpack.c.l.b16 %v652
        %v669 = vunpack.c.l.b16 %v653
        %v670 = vunpack.c.l.b16 %v654
        %v671 = vunpack.c.l.b16 %v655
        %v672 = vunpack.c.l.b16 %v656
        %v673 = vunpack.c.l.b16 %v657
        %v674 = vpack.c.b16 %v667, %v666
        %v675 = vpack.c.b16 %v669, %v668
        %v676 = vpack.c.b16 %v671, %v670
        %v677 = vpack.c.b16 %v673, %v672
        %vm682 = vcmask 523264
        %v684 = vsel %vm682, %v649, 0
        %686 = vmatpush.bf16.msra.mxu0 0
        %687 = vmatpush.bf16.msra.mxu0 0
        %688 = vmatpush.bf16.msra.mxu0 0
        %689 = vmatpush.bf16.msra.mxu0 0
        %690 = vmatpush.bf16.msra.mxu0 %v677
        %691 = vmatpush.bf16.msra.mxu0 %v676
        %692 = vmatpush.bf16.msra.mxu0 %v675
        %693 = vmatpush.bf16.msra.mxu0 %v674
        %694 = vmatmul.bf16.gmra.mxu0 %v684
        %v695 = vpop.f32.mrf.mxu0
        %v696 = vadd.f32 %v606, %v695
        %v697 = vpop.f32.mrf.mxu0
        %v698 = vadd.f32 %v608, %v697
        %699 = vdwg.mxu0
        %v700 = vld [vmem:[%s5] sm:$0x1]
        %v702 = vperm.slane %v700, 0
        %v704 = vadd.f32 %v696, %v702
        %v705 = vadd.f32 %v698, %v702
        %v706 = vmax.f32 %v704, 0.0
        %v707 = vmax.f32 %v705, 0.0
        %v708 = vpack.c.bf16 %v707, %v706
        %v709 = vld [vmem:[%s6] sm:$0xf]
        %v710 = vld [vmem:[%s6 + $0x4] sm:$0xf]
        %v711 = vld [vmem:[%s6 + $0x8] sm:$0xf]
        %v712 = vld [vmem:[%s6 + $0xc] sm:$0xf]
        %v713 = vld [vmem:[%s6 + $0x10] sm:$0xf]
        %v714 = vld [vmem:[%s6 + $0x14] sm:$0xf]
        %v715 = vld [vmem:[%s6 + $0x18] sm:$0xf]
        %v716 = vld [vmem:[%s6 + $0x1c] sm:$0xf]
        %v717 = vld [vmem:[%s6 + $0x20] sm:$0xf]
        %v718 = vld [vmem:[%s6 + $0x24] sm:$0xf]
        %v719 = vld [vmem:[%s6 + $0x28] sm:$0xf]
        %v720 = vld [vmem:[%s6 + $0x2c] sm:$0xf]
        %v721 = vld [vmem:[%s6 + $0x30] sm:$0xf]
        %v722 = vld [vmem:[%s6 + $0x34] sm:$0xf]
        %v723 = vld [vmem:[%s6 + $0x38] sm:$0xf]
        %v724 = vld [vmem:[%s6 + $0x3c] sm:$0xf]
        %v741 = vunpack.c.l.b16 %v709
        %v742 = vunpack.c.l.b16 %v710
        %v743 = vunpack.c.l.b16 %v711
        %v744 = vunpack.c.l.b16 %v712
        %v745 = vunpack.c.l.b16 %v713
        %v746 = vunpack.c.l.b16 %v714
        %v747 = vunpack.c.l.b16 %v715
        %v748 = vunpack.c.l.b16 %v716
        %v749 = vunpack.c.l.b16 %v717
        %v750 = vunpack.c.l.b16 %v718
        %v751 = vunpack.c.l.b16 %v719
        %v752 = vunpack.c.l.b16 %v720
        %v753 = vunpack.c.l.b16 %v721
        %v754 = vunpack.c.l.b16 %v722
        %v755 = vunpack.c.l.b16 %v723
        %v756 = vunpack.c.l.b16 %v724
        %v757 = vpack.c.b16 %v742, %v741
        %v758 = vpack.c.b16 %v744, %v743
        %v759 = vpack.c.b16 %v746, %v745
        %v760 = vpack.c.b16 %v748, %v747
        %v761 = vpack.c.b16 %v750, %v749
        %v762 = vpack.c.b16 %v752, %v751
        %v763 = vpack.c.b16 %v754, %v753
        %v764 = vpack.c.b16 %v756, %v755
        %773 = vmatpush.bf16.msra.mxu0 %v764
        %774 = vmatpush.bf16.msra.mxu0 %v763
        %775 = vmatpush.bf16.msra.mxu0 %v762
        %776 = vmatpush.bf16.msra.mxu0 %v761
        %777 = vmatpush.bf16.msra.mxu0 %v760
        %778 = vmatpush.bf16.msra.mxu0 %v759
        %779 = vmatpush.bf16.msra.mxu0 %v758
        %780 = vmatpush.bf16.msra.mxu0 %v757
        %781 = vmatmul.bf16.gmra.mxu0 %v708
        %v782 = vpop.f32.mrf.mxu0
        %v783 = vadd.f32 0.0, %v782
        %v784 = vpop.f32.mrf.mxu0
        %v785 = vadd.f32 0.0, %v784
        %786 = vdwg.mxu0
        %v787 = vld [vmem:[#allocation7] sm:$0xf]
        %v788 = vld [vmem:[#allocation7 + $0x4] sm:$0xf]
        %v789 = vld [vmem:[#allocation7 + $0x8] sm:$0xf]
        %v790 = vld [vmem:[#allocation7 + $0xc] sm:$0xf]
        %v791 = vld [vmem:[#allocation7 + $0x10] sm:$0xf]
        %v792 = vld [vmem:[#allocation7 + $0x14] sm:$0xf]
        %v793 = vld [vmem:[#allocation7 + $0x18] sm:$0xf]
        %v794 = vld [vmem:[#allocation7 + $0x1c] sm:$0xf]
        %v795 = vld [vmem:[#allocation7 + $0x20] sm:$0xf]
        %v796 = vld [vmem:[#allocation7 + $0x24] sm:$0xf]
        %v797 = vld [vmem:[#allocation7 + $0x28] sm:$0xf]
        %v798 = vld [vmem:[#allocation7 + $0x2c] sm:$0xf]
        %v799 = vld [vmem:[#allocation7 + $0x30] sm:$0xf]
        %v800 = vld [vmem:[#allocation7 + $0x34] sm:$0xf]
        %v801 = vld [vmem:[#allocation7 + $0x38] sm:$0xf]
        %v802 = vld [vmem:[#allocation7 + $0x3c] sm:$0xf]
        %v819 = vunpack.c.l.b16 %v787
        %v820 = vunpack.c.l.b16 %v788
        %v821 = vunpack.c.l.b16 %v789
        %v822 = vunpack.c.l.b16 %v790
        %v823 = vunpack.c.l.b16 %v791
        %v824 = vunpack.c.l.b16 %v792
        %v825 = vunpack.c.l.b16 %v793
        %v826 = vunpack.c.l.b16 %v794
        %v827 = vunpack.c.l.b16 %v795
        %v828 = vunpack.c.l.b16 %v796
        %v829 = vunpack.c.l.b16 %v797
        %v830 = vunpack.c.l.b16 %v798
        %v831 = vunpack.c.l.b16 %v799
        %v832 = vunpack.c.l.b16 %v800
        %v833 = vunpack.c.l.b16 %v801
        %v834 = vunpack.c.l.b16 %v802
        %v835 = vpack.c.b16 %v820, %v819
        %v836 = vpack.c.b16 %v822, %v821
        %v837 = vpack.c.b16 %v824, %v823
        %v838 = vpack.c.b16 %v826, %v825
        %v839 = vpack.c.b16 %v828, %v827
        %v840 = vpack.c.b16 %v830, %v829
        %v841 = vpack.c.b16 %v832, %v831
        %v842 = vpack.c.b16 %v834, %v833
        %851 = vmatpush.bf16.msra.mxu0 %v842
        %852 = vmatpush.bf16.msra.mxu0 %v841
        %853 = vmatpush.bf16.msra.mxu0 %v840
        %854 = vmatpush.bf16.msra.mxu0 %v839
        %855 = vmatpush.bf16.msra.mxu0 %v838
        %856 = vmatpush.bf16.msra.mxu0 %v837
        %857 = vmatpush.bf16.msra.mxu0 %v836
        %858 = vmatpush.bf16.msra.mxu0 %v835
        %859 = vmatmul.bf16.gmra.mxu0 %v708
        %v860 = vpop.f32.mrf.mxu0
        %v861 = vadd.f32 0.0, %v860
        %v862 = vpop.f32.mrf.mxu0
        %v863 = vadd.f32 0.0, %v862
        %864 = vdwg.mxu0
        %v865 = vld [vmem:[#allocation9] sm:$0xf]
        %v866 = vld [vmem:[#allocation9 + $0x4] sm:$0xf]
        %v867 = vld [vmem:[#allocation9 + $0x8] sm:$0xf]
        %v868 = vld [vmem:[#allocation9 + $0xc] sm:$0xf]
        %v869 = vld [vmem:[#allocation9 + $0x10] sm:$0xf]
        %v870 = vld [vmem:[#allocation9 + $0x14] sm:$0xf]
        %v871 = vld [vmem:[#allocation9 + $0x18] sm:$0xf]
        %v872 = vld [vmem:[#allocation9 + $0x1c] sm:$0xf]
        %v873 = vld [vmem:[#allocation9 + $0x20] sm:$0xf]
        %v874 = vld [vmem:[#allocation9 + $0x24] sm:$0xf]
        %v875 = vld [vmem:[#allocation9 + $0x28] sm:$0xf]
        %v876 = vld [vmem:[#allocation9 + $0x2c] sm:$0xf]
        %v877 = vld [vmem:[#allocation9 + $0x30] sm:$0xf]
        %v878 = vld [vmem:[#allocation9 + $0x34] sm:$0xf]
        %v879 = vld [vmem:[#allocation9 + $0x38] sm:$0xf]
        %v880 = vld [vmem:[#allocation9 + $0x3c] sm:$0xf]
        %v897 = vunpack.c.l.b16 %v865
        %v898 = vunpack.c.l.b16 %v866
        %v899 = vunpack.c.l.b16 %v867
        %v900 = vunpack.c.l.b16 %v868
        %v901 = vunpack.c.l.b16 %v869
        %v902 = vunpack.c.l.b16 %v870
        %v903 = vunpack.c.l.b16 %v871
        %v904 = vunpack.c.l.b16 %v872
        %v905 = vunpack.c.l.b16 %v873
        %v906 = vunpack.c.l.b16 %v874
        %v907 = vunpack.c.l.b16 %v875
        %v908 = vunpack.c.l.b16 %v876
        %v909 = vunpack.c.l.b16 %v877
        %v910 = vunpack.c.l.b16 %v878
        %v911 = vunpack.c.l.b16 %v879
        %v912 = vunpack.c.l.b16 %v880
        %v913 = vpack.c.b16 %v898, %v897
        %v914 = vpack.c.b16 %v900, %v899
        %v915 = vpack.c.b16 %v902, %v901
        %v916 = vpack.c.b16 %v904, %v903
        %v917 = vpack.c.b16 %v906, %v905
        %v918 = vpack.c.b16 %v908, %v907
        %v919 = vpack.c.b16 %v910, %v909
        %v920 = vpack.c.b16 %v912, %v911
        %929 = vmatpush.bf16.msra.mxu0 %v920
        %930 = vmatpush.bf16.msra.mxu0 %v919
        %931 = vmatpush.bf16.msra.mxu0 %v918
        %932 = vmatpush.bf16.msra.mxu0 %v917
        %933 = vmatpush.bf16.msra.mxu0 %v916
        %934 = vmatpush.bf16.msra.mxu0 %v915
        %935 = vmatpush.bf16.msra.mxu0 %v914
        %936 = vmatpush.bf16.msra.mxu0 %v913
        %937 = vmatmul.bf16.gmra.mxu0 %v708
        %v938 = vpop.f32.mrf.mxu0
        %v939 = vadd.f32 0.0, %v938
        %v940 = vpop.f32.mrf.mxu0
        %v941 = vadd.f32 0.0, %v940
        %942 = vdwg.mxu0
        %v943 = vpack.c.bf16 %v785, %v783
        %v944 = vpack.c.bf16 %v863, %v861
        %945 = vmatpush.bf16.xpose.msra.mxu0 0
        %946 = vmatpush.bf16.xpose.msra.mxu0 0
        %947 = vmatpush.bf16.xpose.msra.mxu0 0
        %948 = vmatpush.bf16.xpose.msra.mxu0 0
        %949 = vmatpush.bf16.xpose.msra.mxu0 0
        %950 = vmatpush.bf16.xpose.msra.mxu0 0
        %951 = vmatpush.bf16.xpose.msra.mxu0 0
        %952 = vmatpush.bf16.xpose.msra.mxu0 %v944
        %953 = vmatmul.bf16.gmra.mxu0 %v943
        %v954 = vpop.f32.mrf.mxu0
        %v955 = vadd.f32 0.0, %v954
        %v956 = vpop.f32.mrf.mxu0
        %v957 = vadd.f32 0.0, %v956
        %958 = vdwg.mxu0
        %v959 = vstv %s569
        %vm960 = vcmp.lt.s32.totalorder %v573, %v959
        %v961 = vsel %vm960, %v955, -1e+30
        %v962 = vsel %vm960, %v957, -1e+30
        %v963 = vsel %vm631, %v961, -inf
        %964 = vmax.xlane.f32.xlu0 %v963
        %v965 = vpop.xlane.xlu0 %964
        %v966 = vsel %vm631, %v962, -inf
        %967 = vmax.xlane.f32.xlu0 %v966
        %v968 = vpop.xlane.xlu0 %967
        %v969 = vsub.f32 %v961, %v965
        %v970 = vsub.f32 %v962, %v968
        %v971 = vmul.f32 %v969, 1.442695
        %v972 = vpow.pop %v971
        %v973 = vmul.f32 %v970, 1.442695
        %v974 = vpow.pop %v973
        %v975 = vsel %vm631, %v972, 0.0
        %976 = vadd.xlane.f32.xlu0 %v975
        %v977 = vpop.xlane.xlu0 %976
        %v978 = vsel %vm631, %v974, 0.0
        %979 = vadd.xlane.f32.xlu0 %v978
        %v980 = vpop.xlane.xlu0 %979
        %v981 = vrcp.pop %v977
        %v982 = vrcp.pop %v980
        %v983 = vmul.f32 %v972, %v981
        %v984 = vmul.f32 %v974, %v982
        %v985 = vpack.c.bf16 %v984, %v983
        %v986 = vpack.c.bf16 %v941, %v939
        %v988 = vsel %vm631, %v985, 0
        %990 = vmatpush.bf16.msra.mxu0 0
        %991 = vmatpush.bf16.msra.mxu0 0
        %992 = vmatpush.bf16.msra.mxu0 0
        %993 = vmatpush.bf16.msra.mxu0 0
        %994 = vmatpush.bf16.msra.mxu0 0
        %995 = vmatpush.bf16.msra.mxu0 0
        %996 = vmatpush.bf16.msra.mxu0 0
        %997 = vmatpush.bf16.msra.mxu0 %v986
        %998 = vmatmul.bf16.gmra.mxu0 %v988
        %v999 = vpop.f32.mrf.mxu0
        %v1000 = vadd.f32 0.0, %v999
        %v1001 = vpop.f32.mrf.mxu0
        %v1002 = vadd.f32 0.0, %v1001
        %1003 = vdwg.mxu0
        %v1004 = vpack.c.bf16 %v1002, %v1000
        %v1005 = vld [vmem:[#allocation10] sm:$0xf]
        %v1006 = vld [vmem:[#allocation10 + $0x4] sm:$0xf]
        %v1007 = vld [vmem:[#allocation10 + $0x8] sm:$0xf]
        %v1008 = vld [vmem:[#allocation10 + $0xc] sm:$0xf]
        %v1009 = vld [vmem:[#allocation10 + $0x10] sm:$0xf]
        %v1010 = vld [vmem:[#allocation10 + $0x14] sm:$0xf]
        %v1011 = vld [vmem:[#allocation10 + $0x18] sm:$0xf]
        %v1012 = vld [vmem:[#allocation10 + $0x1c] sm:$0xf]
        %v1013 = vld [vmem:[#allocation10 + $0x20] sm:$0xf]
        %v1014 = vld [vmem:[#allocation10 + $0x24] sm:$0xf]
        %v1015 = vld [vmem:[#allocation10 + $0x28] sm:$0xf]
        %v1016 = vld [vmem:[#allocation10 + $0x2c] sm:$0xf]
        %v1017 = vld [vmem:[#allocation10 + $0x30] sm:$0xf]
        %v1018 = vld [vmem:[#allocation10 + $0x34] sm:$0xf]
        %v1019 = vld [vmem:[#allocation10 + $0x38] sm:$0xf]
        %v1020 = vld [vmem:[#allocation10 + $0x3c] sm:$0xf]
        %v1021 = vld [vmem:[%s10] sm:$0x1]
        %v1023 = vperm.slane %v1021, 0
        %v1041 = vunpack.c.l.b16 %v1005
        %v1042 = vunpack.c.l.b16 %v1006
        %v1043 = vunpack.c.l.b16 %v1007
        %v1044 = vunpack.c.l.b16 %v1008
        %v1045 = vunpack.c.l.b16 %v1009
        %v1046 = vunpack.c.l.b16 %v1010
        %v1047 = vunpack.c.l.b16 %v1011
        %v1048 = vunpack.c.l.b16 %v1012
        %v1049 = vunpack.c.l.b16 %v1013
        %v1050 = vunpack.c.l.b16 %v1014
        %v1051 = vunpack.c.l.b16 %v1015
        %v1052 = vunpack.c.l.b16 %v1016
        %v1053 = vunpack.c.l.b16 %v1017
        %v1054 = vunpack.c.l.b16 %v1018
        %v1055 = vunpack.c.l.b16 %v1019
        %v1056 = vunpack.c.l.b16 %v1020
        %v1057 = vpack.c.b16 %v1042, %v1041
        %v1058 = vpack.c.b16 %v1044, %v1043
        %v1059 = vpack.c.b16 %v1046, %v1045
        %v1060 = vpack.c.b16 %v1048, %v1047
        %v1061 = vpack.c.b16 %v1050, %v1049
        %v1062 = vpack.c.b16 %v1052, %v1051
        %v1063 = vpack.c.b16 %v1054, %v1053
        %v1064 = vpack.c.b16 %v1056, %v1055
        %1073 = vmatpush.bf16.msra.mxu0 %v1064
        %1074 = vmatpush.bf16.msra.mxu0 %v1063
        %1075 = vmatpush.bf16.msra.mxu0 %v1062
        %1076 = vmatpush.bf16.msra.mxu0 %v1061
        %1077 = vmatpush.bf16.msra.mxu0 %v1060
        %1078 = vmatpush.bf16.msra.mxu0 %v1059
        %1079 = vmatpush.bf16.msra.mxu0 %v1058
        %1080 = vmatpush.bf16.msra.mxu0 %v1057
        %1081 = vmatmul.bf16.gmra.mxu0 %v1004
        %v1082 = vpop.f32.mrf.mxu0
        %v1083 = vadd.f32 %v1023, %v1082
        %v1084 = vpop.f32.mrf.mxu0
        %v1085 = vadd.f32 %v1023, %v1084
        %1086 = vdwg.mxu0
        %v1087 = vmax.f32 %v1083, 0.0
        %v1088 = vmax.f32 %v1085, 0.0
        %v1089 = vld [vmem:[#allocation12] sm:$0xf]
        %v1090 = vld [vmem:[#allocation12 + $0x4] sm:$0xf]
        %v1091 = vld [vmem:[#allocation12 + $0x8] sm:$0xf]
        %v1092 = vld [vmem:[#allocation12 + $0xc] sm:$0xf]
        %v1093 = vld [vmem:[#allocation12 + $0x10] sm:$0xf]
        %v1094 = vld [vmem:[#allocation12 + $0x14] sm:$0xf]
        %v1095 = vld [vmem:[#allocation12 + $0x18] sm:$0xf]
        %v1096 = vld [vmem:[#allocation12 + $0x1c] sm:$0xf]
        %v1097 = vld [vmem:[#allocation12 + $0x20] sm:$0xf]
        %v1098 = vld [vmem:[#allocation12 + $0x24] sm:$0xf]
        %v1099 = vld [vmem:[#allocation12 + $0x28] sm:$0xf]
        %v1100 = vld [vmem:[#allocation12 + $0x2c] sm:$0xf]
        %v1101 = vld [vmem:[#allocation12 + $0x30] sm:$0xf]
        %v1102 = vld [vmem:[#allocation12 + $0x34] sm:$0xf]
        %v1103 = vld [vmem:[#allocation12 + $0x38] sm:$0xf]
        %v1104 = vld [vmem:[#allocation12 + $0x3c] sm:$0xf]
        %v1105 = vpack.c.bf16 %v1088, %v1087
        %v1106 = vld [vmem:[#allocation13] sm:$0xf]
        %v1107 = vld [vmem:[#allocation13 + $0x4] sm:$0xf]
        %v1108 = vld [vmem:[#allocation13 + $0x8] sm:$0xf]
        %v1109 = vld [vmem:[#allocation13 + $0xc] sm:$0xf]
        %v1110 = vld [vmem:[#allocation13 + $0x10] sm:$0xf]
        %v1111 = vld [vmem:[#allocation13 + $0x14] sm:$0xf]
        %v1112 = vld [vmem:[#allocation13 + $0x18] sm:$0xf]
        %v1113 = vld [vmem:[#allocation13 + $0x1c] sm:$0xf]
        %v1114 = vld [vmem:[#allocation13 + $0x20] sm:$0xf]
        %v1115 = vld [vmem:[#allocation13 + $0x24] sm:$0xf]
        %v1116 = vld [vmem:[#allocation13 + $0x28] sm:$0xf]
        %v1117 = vld [vmem:[#allocation13 + $0x2c] sm:$0xf]
        %v1118 = vld [vmem:[#allocation13 + $0x30] sm:$0xf]
        %v1119 = vld [vmem:[#allocation13 + $0x34] sm:$0xf]
        %v1120 = vld [vmem:[#allocation13 + $0x38] sm:$0xf]
        %v1121 = vld [vmem:[#allocation13 + $0x3c] sm:$0xf]
        %v1138 = vunpack.c.l.b16 %v1106
        %v1139 = vunpack.c.l.b16 %v1107
        %v1140 = vunpack.c.l.b16 %v1108
        %v1141 = vunpack.c.l.b16 %v1109
        %v1142 = vunpack.c.l.b16 %v1110
        %v1143 = vunpack.c.l.b16 %v1111
        %v1144 = vunpack.c.l.b16 %v1112
        %v1145 = vunpack.c.l.b16 %v1113
        %v1146 = vunpack.c.l.b16 %v1114
        %v1147 = vunpack.c.l.b16 %v1115
        %v1148 = vunpack.c.l.b16 %v1116
        %v1149 = vunpack.c.l.b16 %v1117
        %v1150 = vunpack.c.l.b16 %v1118
        %v1151 = vunpack.c.l.b16 %v1119
        %v1152 = vunpack.c.l.b16 %v1120
        %v1153 = vunpack.c.l.b16 %v1121
        %v1154 = vpack.c.b16 %v1139, %v1138
        %v1155 = vpack.c.b16 %v1141, %v1140
        %v1156 = vpack.c.b16 %v1143, %v1142
        %v1157 = vpack.c.b16 %v1145, %v1144
        %v1158 = vpack.c.b16 %v1147, %v1146
        %v1159 = vpack.c.b16 %v1149, %v1148
        %v1160 = vpack.c.b16 %v1151, %v1150
        %v1161 = vpack.c.b16 %v1153, %v1152
        %1170 = vmatpush.bf16.msra.mxu0 %v1161
        %1171 = vmatpush.bf16.msra.mxu0 %v1160
        %1172 = vmatpush.bf16.msra.mxu0 %v1159
        %1173 = vmatpush.bf16.msra.mxu0 %v1158
        %1174 = vmatpush.bf16.msra.mxu0 %v1157
        %1175 = vmatpush.bf16.msra.mxu0 %v1156
        %1176 = vmatpush.bf16.msra.mxu0 %v1155
        %1177 = vmatpush.bf16.msra.mxu0 %v1154
        %1178 = vmatmul.bf16.gmra.mxu0 %v1105
        %v1179 = vpop.f32.mrf.mxu0
        %v1180 = vadd.f32 0.0, %v1179
        %v1181 = vpop.f32.mrf.mxu0
        %v1182 = vadd.f32 0.0, %v1181
        %1183 = vdwg.mxu0
        %v1200 = vunpack.c.l.b16 %v1089
        %v1201 = vunpack.c.l.b16 %v1090
        %v1202 = vunpack.c.l.b16 %v1091
        %v1203 = vunpack.c.l.b16 %v1092
        %v1204 = vunpack.c.l.b16 %v1093
        %v1205 = vunpack.c.l.b16 %v1094
        %v1206 = vunpack.c.l.b16 %v1095
        %v1207 = vunpack.c.l.b16 %v1096
        %v1208 = vunpack.c.l.b16 %v1097
        %v1209 = vunpack.c.l.b16 %v1098
        %v1210 = vunpack.c.l.b16 %v1099
        %v1211 = vunpack.c.l.b16 %v1100
        %v1212 = vunpack.c.l.b16 %v1101
        %v1213 = vunpack.c.l.b16 %v1102
        %v1214 = vunpack.c.l.b16 %v1103
        %v1215 = vunpack.c.l.b16 %v1104
        %v1216 = vpack.c.b16 %v1201, %v1200
        %v1217 = vpack.c.b16 %v1203, %v1202
        %v1218 = vpack.c.b16 %v1205, %v1204
        %v1219 = vpack.c.b16 %v1207, %v1206
        %v1220 = vpack.c.b16 %v1209, %v1208
        %v1221 = vpack.c.b16 %v1211, %v1210
        %v1222 = vpack.c.b16 %v1213, %v1212
        %v1223 = vpack.c.b16 %v1215, %v1214
        %1232 = vmatpush.bf16.msra.mxu0 %v1223
        %1233 = vmatpush.bf16.msra.mxu0 %v1222
        %1234 = vmatpush.bf16.msra.mxu0 %v1221
        %1235 = vmatpush.bf16.msra.mxu0 %v1220
        %1236 = vmatpush.bf16.msra.mxu0 %v1219
        %1237 = vmatpush.bf16.msra.mxu0 %v1218
        %1238 = vmatpush.bf16.msra.mxu0 %v1217
        %1239 = vmatpush.bf16.msra.mxu0 %v1216
        %1240 = vmatmul.bf16.gmra.mxu0 %v708
        %v1241 = vpop.f32.mrf.mxu0
        %v1242 = vadd.f32 %v1180, %v1241
        %v1243 = vpop.f32.mrf.mxu0
        %v1244 = vadd.f32 %v1182, %v1243
        %1245 = vdwg.mxu0
        %v1246 = vld [vmem:[%s13] sm:$0x1]
        %v1248 = vperm.slane %v1246, 0
        %v1250 = vadd.f32 %v1242, %v1248
        %v1251 = vadd.f32 %v1244, %v1248
        %v1252 = vxor.u32 %v1250, 2147483648
        %v1253 = vxor.u32 %v1251, 2147483648
        %v1254 = vmul.f32 %v1252, 1.442695
        %v1255 = vpow.pop %v1254
        %v1256 = vmul.f32 %v1253, 1.442695
        %v1257 = vpow.pop %v1256
        %v1258 = vadd.f32 %v1255, 1.0
        %v1259 = vadd.f32 %v1257, 1.0
        %v1260 = vrcp.pop %v1258
        %v1261 = vmul.f32 %v1258, %v1260
        %v1262 = vsub.f32 1.0, %v1261
        %v1263 = vmul.f32 %v1260, %v1262
        %v1264 = vadd.f32 %v1260, %v1263
        %vm1265 = vweird.f32 %v1258
        %vm1266 = vweird.f32 %v1260
        %vm1267 = vmor %vm1265, %vm1266
        %v1268 = vsel %vm1267, %v1260, %v1264
        %v1269 = vand.u32 2147483647, %v1258
        %vm1270 = vcmp.eq.f32.partialorder %v1269, 8.507059e+37
        %v1271 = vand.u32 %v1258, 2147483648
        %v1272 = vor.u32 1.1754944e-38, %v1271
        %v1273 = vsel %vm1270, %v1272, %v1268
        %v1274 = vmul.f32 1.0, %v1273
        %v1275 = vrcp.pop %v1259
        %v1276 = vmul.f32 %v1259, %v1275
        %v1277 = vsub.f32 1.0, %v1276
        %v1278 = vmul.f32 %v1275, %v1277
        %v1279 = vadd.f32 %v1275, %v1278
        %vm1280 = vweird.f32 %v1259
        %vm1281 = vweird.f32 %v1275
        %vm1282 = vmor %vm1280, %vm1281
        %v1283 = vsel %vm1282, %v1275, %v1279
        %v1284 = vand.u32 2147483647, %v1259
        %vm1285 = vcmp.eq.f32.partialorder %v1284, 8.507059e+37
        %v1286 = vand.u32 %v1259, 2147483648
        %v1287 = vor.u32 1.1754944e-38, %v1286
        %v1288 = vsel %vm1285, %v1287, %v1283
        %v1289 = vmul.f32 1.0, %v1288
        %v1290 = vmul.f32 %v1274, %v706
        %v1291 = vmul.f32 %v1289, %v707
        %v1292 = vsub.f32 1.0, %v1274
        %v1293 = vsub.f32 1.0, %v1289
        %v1294 = vmul.f32 %v1292, %v1087
        %v1295 = vmul.f32 %v1293, %v1088
        %v1296 = vadd.f32 %v1290, %v1294
        %v1297 = vadd.f32 %v1291, %v1295
        %v1298 = vlaneseq
        %v1299 = vshrl.u32 %v1298, 7
        %v1300 = vadd.s32 %v1299, 8
        %vm1301 = vcmp.lt.s32.totalorder %v1299, %v959
        %vm1302 = vcmp.lt.s32.totalorder %v1300, %v959
        %v1303 = vsel %vm1301, 1, 0
        %v1304 = vsel %vm1302, 1, 0
        %vm1305 = vcmp.eq.s32.totalorder %v1303, 1
        %vm1306 = vcmp.eq.s32.totalorder %v1304, 1
        %v1307 = vsel %vm1305, %v1296, 0.0
        %v1308 = vsel %vm1306, %v1297, 0.0
        %1309 = vst [vmem:[%s557] sm:$0xff] %v1307
        %1310 = vst [vmem:[%s557 + $0x8] sm:$0xff] %v1308
        %s1311 = sand.u32 %s331, 1
        %s1312 = scalar_lea.sflag [#allocation6], %s1311
        %s1313 = sand.u32 %s331, 1
        %s1314 = smul.addr %s1313, 16
        %s1315 = scalar_lea.vmem [#allocation15], %s1314
        // Predicated region
        $region97: #{tpu_custom_call.1} parent=71 // pred_check
          %p1316 = pneg %p341
        $region98: #{tpu_custom_call.1} parent=71 // pred_check_branch
          %1318 = sbr.rel (%p1316) target = $region100
        $region99: #{tpu_custom_call.1} parent=71 // pred_region
          %1320 = vsyncadd %s1312, 0
          %s1321 = smul.addr %s40, 2
          %s1322 = smul.addr %s1321, 8
          %s1323 = scalar_lea.hbm %s14, %s1322
          %s1324 = sshll.u32 %s1315, 4
          %s1325 = int_to_ptr.vmem [resolvable:$true] %s1324
          %s1326 = sshll.u32 %s1323, 4
          %s1327 = int_to_ptr.hbm [resolvable:$true] %s1326
          %1332 = dma.vmem_to_hbm [thread:$0]  %s1325, 256, %s1327, %s1312, 128, 128, 8
        $region100: #{tpu_custom_call.1} parent=71 // pred_fallthru
          _
      $region72: #{tpu_custom_call.1} parent=5 // pred_fallthru
        _
      %p1333 = scmp.le.s32.totalorder 2, %s35
      // Predicated region
      $region101: #{tpu_custom_call.1} parent=5 // pred_check
        %p1334 = pneg %p1333
      $region102: #{tpu_custom_call.1} parent=5 // pred_check_branch
        %1336 = sbr.rel (%p1334) target = $region104
      $region103: #{tpu_custom_call.1} parent=5 // pred_region
        %s1337 = ssub.s32 %s35, 2
        // Predicated region
        $region105: #{tpu_custom_call.1} parent=103 // pred_check
          %p1338 = pneg %p347
        $region106: #{tpu_custom_call.1} parent=103 // pred_check_branch
          %1340 = sbr.rel (%p1338) target = $region108
        $region107: #{tpu_custom_call.1} parent=103 // pred_region
          %s1341 = sand.u32 %s332, 1
          %s1342 = scalar_lea.sflag [#allocation6], %s1341
          %s1343 = sand.u32 %s332, 1
          %s1344 = smul.addr %s1343, 16
          %s1345 = scalar_lea.vmem [#allocation15], %s1344
          %1347 = dma.done %s1342, 256
        $region108: #{tpu_custom_call.1} parent=103 // pred_fallthru
          _
      $region104: #{tpu_custom_call.1} parent=5 // pred_fallthru
        _
    $region6: #{tpu_custom_call.1} parent=1 // loop_footer
      %s39 = sadd.s32 1, %s35
    $region7: #{tpu_custom_call.1} parent=1 // loop_footer_branch
      %34 = sbr.rel target = $region3
    $region8: #{tpu_custom_call.1} parent=1 // loop_exit
      _
    %1348 = vsyncpa [#allocation5], 1
    %s1349 = scalar_lea.sflag [#allocation5], 1
    %1350 = vsyncpa %s1349, 1
    %1351 = vsyncpa [#allocation8], 1
    %1352 = vsyncpa [#allocation11], 1
    %1353 = vsyncpa [#allocation14], 1
    %1354 = vsyncpa [#allocation6], 1
    %s1355 = scalar_lea.sflag [#allocation6], 1
    %1356 = vsyncpa %s1355, 1

</llo_original>
